<compile_context>
chip_gen: v5e
topology: v5e:2x2
jax: 0.10.0
libtpu: 0.0.40
codegen_flags: <defaults>
</compile_context>

<pallas_src>
import functools

import jax
import jax.numpy as jnp
import numpy as np
from jax import lax
from jax.experimental import pallas as pl
from jax.experimental.pallas import tpu as pltpu


# ---------------------------------------------------------------------------
# Fused kernel: embed + input projections (2 matmuls), bidirectional LSTM
# recurrence (fori_loop over T, one block-diag matmul/step), time-mean + heads.
# ---------------------------------------------------------------------------
def _calstm_fused_kernel(xcol_ref, wconv_ref, bconv_ref, wih_ref, bih_ref,
                         whh_ref, whead_ref, bhead_ref, out_ref,
                         xp, h, c, acc, *, T, Bp, C):
    # ---- Stage 1: Conv1d(k=3,pad=0) as im2col matmul + ReLU, then the
    #      time-invariant input->gate projections for BOTH directions.
    #      xcol_ref is (T*Bp, 12) = [fwd window | time-reversed window];
    #      wconv_ref is block-diagonal (12, 2C) so emb = [emb_fwd | emb_rev].
    emb = jnp.dot(xcol_ref[...], wconv_ref[...], preferred_element_type=jnp.float32)
    emb = jnp.maximum(emb + bconv_ref[...], 0.0)                       # (T*Bp, 2C)
    # wih_ref is block-diagonal, gate-interleaved (2C, 8C); bih combines b_ih + b_hh.
    xp[...] = (jnp.dot(emb, wih_ref[...], preferred_element_type=jnp.float32)
               + bih_ref[...])                                         # (T*Bp, 8C)

    # ---- Stage 2: recurrence.  h/c/acc are (Bp, 2C): fwd dir in cols 0:C, bwd in C:2C.
    h[...] = jnp.zeros_like(h)
    c[...] = jnp.zeros_like(c)
    acc[...] = jnp.zeros_like(acc)
    whh = whh_ref[...]                                                 # hoisted (2C, 8C)

    def step(t, carry):
        # Bp is a multiple of 8 -> sublane-aligned dynamic slice of the xproj slab.
        x_t = xp[pl.ds(t * Bp, Bp), :]                                 # (Bp, 8C)
        gates = x_t + jnp.dot(h[...], whh, preferred_element_type=jnp.float32)
        # Interleaved gate columns: [i_f,i_b | f_f,f_b | g_f,g_b | o_f,o_b], each C wide.
        sig = jax.nn.sigmoid(gates)                                    # one full-width sigmoid
        i_cat = sig[:, 0:2 * C]
        f_cat = sig[:, 2 * C:4 * C]
        g_cat = jnp.tanh(gates[:, 4 * C:6 * C])
        o_cat = sig[:, 6 * C:8 * C]
        c_new = f_cat * c[...] + i_cat * g_cat
        h_new = o_cat * jnp.tanh(c_new)
        c[...] = c_new
        h[...] = h_new
        acc[...] = acc[...] + h_new
        return carry

    lax.fori_loop(0, T, step, 0, unroll=True)

    # ---- Stage 3: time-mean + fused (pre | logvar) heads.
    feat = acc[...] * jnp.float32(1.0 / T)                             # (Bp, 2C)
    out_ref[...] = (jnp.dot(feat, whead_ref[...], preferred_element_type=jnp.float32)
                    + bhead_ref[...])                                  # (Bp, 6)


# ---------------------------------------------------------------------------
# Wrapper: im2col, block-diagonal weight packing, single pallas_call.
# ---------------------------------------------------------------------------
def _calstm_var_avg_forward(cp_en, signal_en, params):
    B, _, L = cp_en.shape
    T = L - 2
    assert T >= 1, "sequence length must be >= 3 (Conv1d k=3, pad=0)"
    C = params["conv_b"].shape[0]
    Bp = ((B + 7) // 8) * 8                       # pad batch to a sublane multiple

    # torch.cat((signal_en, cp_en), dim=1) -> (B, 2, L)
    param = jnp.concatenate([signal_en, cp_en], axis=1)

    # im2col, time-major: xcol[t, b, i*3+k] = param[b, i, t+k]
    windows = jnp.stack([param[:, :, k:k + T] for k in range(3)], axis=-1)  # (B,2,T,3)
    xcol = windows.transpose(2, 0, 1, 3).reshape(T, B, 6)
    # fwd window | time-reversed window (input for the backward direction at loop step t)
    xcol_cat = jnp.concatenate([xcol, xcol[::-1]], axis=-1)                 # (T, B, 12)
    if Bp > B:
        xcol_cat = jnp.pad(xcol_cat, ((0, 0), (0, Bp - B), (0, 0)))
    xcol_cat = xcol_cat.reshape(T * Bp, 12)

    # Conv weight as block-diagonal (12, 2C) so one matmul gives [emb_fwd | emb_rev].
    wc = params["conv_w"].reshape(C, 6).T                                   # (6, C)
    z6 = jnp.zeros((6, C), jnp.float32)
    wconv_bd = jnp.concatenate(
        [jnp.concatenate([wc, z6], axis=1),
         jnp.concatenate([z6, wc], axis=1)], axis=0)                        # (12, 2C)
    bconv = jnp.concatenate([params["conv_b"], params["conv_b"]]).reshape(1, 2 * C)

    # Block-diagonal, gate-interleaved (2C, 8C) weights:
    # rows 0:C <- fwd state/emb, rows C:2C <- bwd; columns laid out as (gate, dir, C).
    def interleave_bd(wf, wb):
        wf_t = wf.T.reshape(C, 4, 1, C)
        wb_t = wb.T.reshape(C, 4, 1, C)
        zf = jnp.zeros_like(wf_t)
        top = jnp.concatenate([wf_t, zf], axis=2)                           # (C, 4, 2, C)
        bot = jnp.concatenate([zf, wb_t], axis=2)                           # (C, 4, 2, C)
        return jnp.concatenate([top, bot], axis=0).reshape(2 * C, 8 * C)

    wih_bd = interleave_bd(params["w_ih_f"], params["w_ih_b"])
    whh_bd = interleave_bd(params["w_hh_f"], params["w_hh_b"])
    bf = (params["b_ih_f"] + params["b_hh_f"]).reshape(4, C)
    bb = (params["b_ih_b"] + params["b_hh_b"]).reshape(4, C)
    bih = jnp.stack([bf, bb], axis=1).reshape(1, 8 * C)                     # (1, 8C)

    # Heads fused: columns 0:3 = pre, 3:6 = logvar.
    whead = jnp.concatenate([params["pre_w"].T, params["logvar_w"].T], axis=1)   # (2C, 6)
    bhead = jnp.concatenate([params["pre_b"], params["logvar_b"]]).reshape(1, 6)

    kernel = functools.partial(_calstm_fused_kernel, T=T, Bp=Bp, C=C)

    flops = int(2 * T * Bp * 12 * 2 * C            # conv matmul
                + 2 * T * Bp * 2 * C * 8 * C       # input projections
                + 2 * T * Bp * 2 * C * 8 * C       # recurrence
                + 2 * Bp * 2 * C * 6)              # heads
    transcendentals = int(T * Bp * 12 * C)         # sigmoid(8C) + 2x tanh(2C) per step
    bytes_accessed = int(4 * (T * Bp * 12 + 12 * 2 * C + 2 * (2 * C * 8 * C)
                              + 2 * C + 8 * C + 2 * C * 6 + 6 + Bp * 6))

    out6 = pl.pallas_call(
        kernel,
        out_shape=jax.ShapeDtypeStruct((Bp, 6), jnp.float32),
        scratch_shapes=[
            pltpu.VMEM((T * Bp, 8 * C), jnp.float32),   # xproj slab (both directions)
            pltpu.VMEM((Bp, 2 * C), jnp.float32),       # h  [fwd | bwd]
            pltpu.VMEM((Bp, 2 * C), jnp.float32),       # c  [fwd | bwd]
            pltpu.VMEM((Bp, 2 * C), jnp.float32),       # sum_t h_t
        ],
        cost_estimate=pl.CostEstimate(
            flops=flops, transcendentals=transcendentals, bytes_accessed=bytes_accessed),
    )(xcol_cat, wconv_bd, bconv, wih_bd, bih, whh_bd, whead, bhead)

    pre = out6[:B, 0:3]
    logvar = out6[:B, 3:6]
    # torch.split(..., 1, dim=1): 3 + 3 tensors of shape (B, 1)
    return tuple(pre[:, i:i + 1] for i in range(3)) + \
           tuple(logvar[:, i:i + 1] for i in range(3))


calstm_var_avg_forward = jax.jit(_calstm_var_avg_forward)


# ---------------------------------------------------------------------------
# Deterministic parameter init (shapes match the PyTorch module, levels=1)
# ---------------------------------------------------------------------------
def init_params(key, channel_num):
    C = channel_num
    ks = jax.random.split(key, 14)
    u = lambda k, shape, s: jax.random.uniform(k, shape, jnp.float32, -s, s)
    s_conv = 1.0 / np.sqrt(2 * 3)
    s_lstm = 1.0 / np.sqrt(C)
    s_lin = 1.0 / np.sqrt(2 * C)
    return dict(
        conv_w=u(ks[0], (C, 2, 3), s_conv), conv_b=u(ks[1], (C,), s_conv),
        w_ih_f=u(ks[2], (4 * C, C), s_lstm), w_hh_f=u(ks[3], (4 * C, C), s_lstm),
        b_ih_f=u(ks[4], (4 * C,), s_lstm), b_hh_f=u(ks[5], (4 * C,), s_lstm),
        w_ih_b=u(ks[6], (4 * C, C), s_lstm), w_hh_b=u(ks[7], (4 * C, C), s_lstm),
        b_ih_b=u(ks[8], (4 * C,), s_lstm), b_hh_b=u(ks[9], (4 * C,), s_lstm),
        pre_w=u(ks[10], (3, 2 * C), s_lin), pre_b=u(ks[11], (3,), s_lin),
        logvar_w=u(ks[12], (3, 2 * C), s_lin), logvar_b=u(ks[13], (3,), s_lin),
    )


# ---------------------------------------------------------------------------
# Pure-JAX reference (mirrors PyTorch semantics) for a correctness check
# ---------------------------------------------------------------------------
def reference_forward(cp_en, signal_en, p):
    param = jnp.concatenate([signal_en, cp_en], axis=1)
    B, _, L = param.shape
    T = L - 2
    C = p["conv_b"].shape[0]
    wc = p["conv_w"].reshape(C, 6)
    emb = jnp.stack(
        [param[:, :, t:t + 3].reshape(B, 6) @ wc.T + p["conv_b"] for t in range(T)], 0)
    emb = jnp.maximum(emb, 0.0)                                  # (T, B, C)

    def run_dir(xs, w_ih, w_hh, b_ih, b_hh):
        h = jnp.zeros((B, C), jnp.float32)
        c = jnp.zeros((B, C), jnp.float32)
        outs = []
        for t in range(xs.shape[0]):
            g = xs[t] @ w_ih.T + b_ih + h @ w_hh.T + b_hh
            i = jax.nn.sigmoid(g[:, :C]); f = jax.nn.sigmoid(g[:, C:2 * C])
            gg = jnp.tanh(g[:, 2 * C:3 * C]); o = jax.nn.sigmoid(g[:, 3 * C:])
            c = f * c + i * gg
            h = o * jnp.tanh(c)
            outs.append(h)
        return jnp.stack(outs, 0)

    out_f = run_dir(emb, p["w_ih_f"], p["w_hh_f"], p["b_ih_f"], p["b_hh_f"])
    out_b = run_dir(emb[::-1], p["w_ih_b"], p["w_hh_b"], p["b_ih_b"], p["b_hh_b"])[::-1]
    feature = jnp.concatenate([out_f, out_b], axis=-1).mean(axis=0)   # (B, 2C)
    pre = feature @ p["pre_w"].T + p["pre_b"]
    logvar = feature @ p["logvar_w"].T + p["logvar_b"]
    return tuple(pre[:, i:i + 1] for i in range(3)) + \
           tuple(logvar[:, i:i + 1] for i in range(3))


if __name__ == "__main__":
    B, L, C = 2, 16, 32   # small shapes; channel_num=32, levels=1, seq len 16 -> T=14
    key = jax.random.PRNGKey(0)
    k_cp, k_sig, k_param = jax.random.split(key, 3)
    cp_en = jax.random.normal(k_cp, (B, 1, L), jnp.float32)
    signal_en = jax.random.normal(k_sig, (B, 1, L), jnp.float32)
    params = init_params(k_param, C)

    outs = calstm_var_avg_forward(cp_en, signal_en, params)
    outs = jax.block_until_ready(outs)

    refs = reference_forward(cp_en, signal_en, params)
    for o, r in zip(outs, refs):
        assert o.shape == (B, 1), o.shape
        assert np.allclose(np.asarray(o), np.asarray(r), rtol=1e-3, atol=1e-4)

    print("KERNEL_OK")
</pallas_src>

<mosaic_0001>
module attributes {stable_mosaic.version = 11 : i64} {
  func.func @_calstm_fused_kernel(%arg0: memref<112x12xf32, #tpu.memory_space<vmem>>, %arg1: memref<12x64xf32, #tpu.memory_space<vmem>>, %arg2: memref<1x64xf32, #tpu.memory_space<vmem>>, %arg3: memref<64x256xf32, #tpu.memory_space<vmem>>, %arg4: memref<1x256xf32, #tpu.memory_space<vmem>>, %arg5: memref<64x256xf32, #tpu.memory_space<vmem>>, %arg6: memref<64x6xf32, #tpu.memory_space<vmem>>, %arg7: memref<1x6xf32, #tpu.memory_space<vmem>>, %arg8: memref<8x6xf32, #tpu.memory_space<vmem>>, %arg9: memref<112x256xf32, #tpu.memory_space<vmem>>, %arg10: memref<8x64xf32, #tpu.memory_space<vmem>>, %arg11: memref<8x64xf32, #tpu.memory_space<vmem>>, %arg12: memref<8x64xf32, #tpu.memory_space<vmem>>) attributes {dimension_semantics = [], scalar_prefetch = 0 : i64, scratch_operands = 4 : i64, tpu.core_type = #tpu.core_type<tc>} {
    %c0 = arith.constant 0 : index
    %c0_0 = arith.constant 0 : index
    %0 = vector.load %arg0[%c0, %c0_0] : memref<112x12xf32, #tpu.memory_space<vmem>>, vector<112x12xf32>
    %c0_1 = arith.constant 0 : index
    %c0_2 = arith.constant 0 : index
    %1 = vector.load %arg1[%c0_1, %c0_2] : memref<12x64xf32, #tpu.memory_space<vmem>>, vector<12x64xf32>
    %cst = arith.constant dense<0.000000e+00> : vector<112x64xf32>
    %2 = tpu.matmul %0, %1, %cst {dimension_numbers = #tpu.dot_dimension_numbers<[1], [0], [0], [1], [0, 0, 1, 1], [], []>} : vector<112x12xf32>, vector<12x64xf32>, vector<112x64xf32> -> vector<112x64xf32>
    %c0_3 = arith.constant 0 : index
    %c0_4 = arith.constant 0 : index
    %3 = vector.load %arg2[%c0_3, %c0_4] : memref<1x64xf32, #tpu.memory_space<vmem>>, vector<1x64xf32>
    %4 = vector.broadcast %3 : vector<1x64xf32> to vector<112x64xf32>
    %5 = arith.addf %2, %4 : vector<112x64xf32>
    %cst_5 = arith.constant 0.000000e+00 : f32
    %6 = vector.broadcast %cst_5 : f32 to vector<112x64xf32>
    %7 = arith.maximumf %5, %6 : vector<112x64xf32>
    %c0_6 = arith.constant 0 : index
    %c0_7 = arith.constant 0 : index
    %8 = vector.load %arg3[%c0_6, %c0_7] : memref<64x256xf32, #tpu.memory_space<vmem>>, vector<64x256xf32>
    %cst_8 = arith.constant dense<0.000000e+00> : vector<112x256xf32>
    %9 = tpu.matmul %7, %8, %cst_8 {dimension_numbers = #tpu.dot_dimension_numbers<[1], [0], [0], [1], [0, 0, 1, 1], [], []>} : vector<112x64xf32>, vector<64x256xf32>, vector<112x256xf32> -> vector<112x256xf32>
    %c0_9 = arith.constant 0 : index
    %c0_10 = arith.constant 0 : index
    %10 = vector.load %arg4[%c0_9, %c0_10] : memref<1x256xf32, #tpu.memory_space<vmem>>, vector<1x256xf32>
    %11 = vector.broadcast %10 : vector<1x256xf32> to vector<112x256xf32>
    %12 = arith.addf %9, %11 : vector<112x256xf32>
    %c0_11 = arith.constant 0 : index
    %c0_12 = arith.constant 0 : index
    %13 = vector.load %arg9[%c0_11, %c0_12] : memref<112x256xf32, #tpu.memory_space<vmem>>, vector<112x256xf32>
    tpu.vector_store %arg9[%c0_11, %c0_12], %12 {strides = array<i32>} : memref<112x256xf32, #tpu.memory_space<vmem>>, vector<112x256xf32>,
    %cst_13 = arith.constant 0.000000e+00 : f32
    %14 = vector.broadcast %cst_13 : f32 to vector<8x64xf32>
    %c0_14 = arith.constant 0 : index
    %c0_15 = arith.constant 0 : index
    %15 = vector.load %arg10[%c0_14, %c0_15] : memref<8x64xf32, #tpu.memory_space<vmem>>, vector<8x64xf32>
    tpu.vector_store %arg10[%c0_14, %c0_15], %14 {strides = array<i32>} : memref<8x64xf32, #tpu.memory_space<vmem>>, vector<8x64xf32>,
    %cst_16 = arith.constant 0.000000e+00 : f32
    %16 = vector.broadcast %cst_16 : f32 to vector<8x64xf32>
    %c0_17 = arith.constant 0 : index
    %c0_18 = arith.constant 0 : index
    %17 = vector.load %arg11[%c0_17, %c0_18] : memref<8x64xf32, #tpu.memory_space<vmem>>, vector<8x64xf32>
    tpu.vector_store %arg11[%c0_17, %c0_18], %16 {strides = array<i32>} : memref<8x64xf32, #tpu.memory_space<vmem>>, vector<8x64xf32>,
    %cst_19 = arith.constant 0.000000e+00 : f32
    %18 = vector.broadcast %cst_19 : f32 to vector<8x64xf32>
    %c0_20 = arith.constant 0 : index
    %c0_21 = arith.constant 0 : index
    %19 = vector.load %arg12[%c0_20, %c0_21] : memref<8x64xf32, #tpu.memory_space<vmem>>, vector<8x64xf32>
    tpu.vector_store %arg12[%c0_20, %c0_21], %18 {strides = array<i32>} : memref<8x64xf32, #tpu.memory_space<vmem>>, vector<8x64xf32>,
    %c0_22 = arith.constant 0 : index
    %c0_23 = arith.constant 0 : index
    %20 = vector.load %arg5[%c0_22, %c0_23] : memref<64x256xf32, #tpu.memory_space<vmem>>, vector<64x256xf32>
    %c0_i32 = arith.constant 0 : i32
    %c8_i32 = arith.constant 8 : i32
    %21 = arith.muli %c0_i32, %c8_i32 : i32
    %22 = arith.index_cast %21 : i32 to index
    %c0_24 = arith.constant 0 : index
    %23 = vector.load %arg9[%22, %c0_24] : memref<112x256xf32, #tpu.memory_space<vmem>>, vector<8x256xf32>
    %c0_25 = arith.constant 0 : index
    %c0_26 = arith.constant 0 : index
    %24 = vector.load %arg10[%c0_25, %c0_26] : memref<8x64xf32, #tpu.memory_space<vmem>>, vector<8x64xf32>
    %cst_27 = arith.constant dense<0.000000e+00> : vector<8x256xf32>
    %25 = tpu.matmul %24, %20, %cst_27 {dimension_numbers = #tpu.dot_dimension_numbers<[1], [0], [0], [1], [0, 0, 1, 1], [], []>} : vector<8x64xf32>, vector<64x256xf32>, vector<8x256xf32> -> vector<8x256xf32>
    %26 = arith.addf %23, %25 : vector<8x256xf32>
    %27 = arith.negf %26 : vector<8x256xf32>
    %28 = math.exp %27 : vector<8x256xf32>
    %cst_28 = arith.constant 1.000000e+00 : f32
    %29 = vector.broadcast %cst_28 : f32 to vector<8x256xf32>
    %30 = arith.addf %29, %28 : vector<8x256xf32>
    %31 = arith.divf %29, %30 : vector<8x256xf32>
    %32 = vector.extract_strided_slice %31 {offsets = [0, 0], sizes = [8, 64], strides = [1, 1]} : vector<8x256xf32> to vector<8x64xf32>
    %33 = vector.extract_strided_slice %31 {offsets = [0, 64], sizes = [8, 64], strides = [1, 1]} : vector<8x256xf32> to vector<8x64xf32>
    %34 = vector.extract_strided_slice %26 {offsets = [0, 128], sizes = [8, 64], strides = [1, 1]} : vector<8x256xf32> to vector<8x64xf32>
    %35 = math.tanh %34 : vector<8x64xf32>
    %36 = vector.extract_strided_slice %31 {offsets = [0, 192], sizes = [8, 64], strides = [1, 1]} : vector<8x256xf32> to vector<8x64xf32>
    %c0_29 = arith.constant 0 : index
    %c0_30 = arith.constant 0 : index
    %37 = vector.load %arg11[%c0_29, %c0_30] : memref<8x64xf32, #tpu.memory_space<vmem>>, vector<8x64xf32>
    %38 = arith.mulf %33, %37 : vector<8x64xf32>
    %39 = arith.mulf %32, %35 : vector<8x64xf32>
    %40 = arith.addf %38, %39 : vector<8x64xf32>
    %41 = math.tanh %40 : vector<8x64xf32>
    %42 = arith.mulf %36, %41 : vector<8x64xf32>
    %c0_31 = arith.constant 0 : index
    %c0_32 = arith.constant 0 : index
    %43 = vector.load %arg11[%c0_31, %c0_32] : memref<8x64xf32, #tpu.memory_space<vmem>>, vector<8x64xf32>
    tpu.vector_store %arg11[%c0_31, %c0_32], %40 {strides = array<i32>} : memref<8x64xf32, #tpu.memory_space<vmem>>, vector<8x64xf32>,
    %c0_33 = arith.constant 0 : index
    %c0_34 = arith.constant 0 : index
    %44 = vector.load %arg10[%c0_33, %c0_34] : memref<8x64xf32, #tpu.memory_space<vmem>>, vector<8x64xf32>
    tpu.vector_store %arg10[%c0_33, %c0_34], %42 {strides = array<i32>} : memref<8x64xf32, #tpu.memory_space<vmem>>, vector<8x64xf32>,
    %c0_35 = arith.constant 0 : index
    %c0_36 = arith.constant 0 : index
    %45 = vector.load %arg12[%c0_35, %c0_36] : memref<8x64xf32, #tpu.memory_space<vmem>>, vector<8x64xf32>
    %46 = arith.addf %45, %42 : vector<8x64xf32>
    %c0_37 = arith.constant 0 : index
    %c0_38 = arith.constant 0 : index
    %47 = vector.load %arg12[%c0_37, %c0_38] : memref<8x64xf32, #tpu.memory_space<vmem>>, vector<8x64xf32>
    tpu.vector_store %arg12[%c0_37, %c0_38], %46 {strides = array<i32>} : memref<8x64xf32, #tpu.memory_space<vmem>>, vector<8x64xf32>,
    %c1_i32 = arith.constant 1 : i32
    %c8_i32_39 = arith.constant 8 : i32
    %48 = arith.muli %c1_i32, %c8_i32_39 : i32
    %49 = arith.index_cast %48 : i32 to index
    %c0_40 = arith.constant 0 : index
    %50 = vector.load %arg9[%49, %c0_40] : memref<112x256xf32, #tpu.memory_space<vmem>>, vector<8x256xf32>
    %c0_41 = arith.constant 0 : index
    %c0_42 = arith.constant 0 : index
    %51 = vector.load %arg10[%c0_41, %c0_42] : memref<8x64xf32, #tpu.memory_space<vmem>>, vector<8x64xf32>
    %cst_43 = arith.constant dense<0.000000e+00> : vector<8x256xf32>
    %52 = tpu.matmul %51, %20, %cst_43 {dimension_numbers = #tpu.dot_dimension_numbers<[1], [0], [0], [1], [0, 0, 1, 1], [], []>} : vector<8x64xf32>, vector<64x256xf32>, vector<8x256xf32> -> vector<8x256xf32>
    %53 = arith.addf %50, %52 : vector<8x256xf32>
    %54 = arith.negf %53 : vector<8x256xf32>
    %55 = math.exp %54 : vector<8x256xf32>
    %cst_44 = arith.constant 1.000000e+00 : f32
    %56 = vector.broadcast %cst_44 : f32 to vector<8x256xf32>
    %57 = arith.addf %56, %55 : vector<8x256xf32>
    %58 = arith.divf %56, %57 : vector<8x256xf32>
    %59 = vector.extract_strided_slice %58 {offsets = [0, 0], sizes = [8, 64], strides = [1, 1]} : vector<8x256xf32> to vector<8x64xf32>
    %60 = vector.extract_strided_slice %58 {offsets = [0, 64], sizes = [8, 64], strides = [1, 1]} : vector<8x256xf32> to vector<8x64xf32>
    %61 = vector.extract_strided_slice %53 {offsets = [0, 128], sizes = [8, 64], strides = [1, 1]} : vector<8x256xf32> to vector<8x64xf32>
    %62 = math.tanh %61 : vector<8x64xf32>
    %63 = vector.extract_strided_slice %58 {offsets = [0, 192], sizes = [8, 64], strides = [1, 1]} : vector<8x256xf32> to vector<8x64xf32>
    %c0_45 = arith.constant 0 : index
    %c0_46 = arith.constant 0 : index
    %64 = vector.load %arg11[%c0_45, %c0_46] : memref<8x64xf32, #tpu.memory_space<vmem>>, vector<8x64xf32>
    %65 = arith.mulf %60, %64 : vector<8x64xf32>
    %66 = arith.mulf %59, %62 : vector<8x64xf32>
    %67 = arith.addf %65, %66 : vector<8x64xf32>
    %68 = math.tanh %67 : vector<8x64xf32>
    %69 = arith.mulf %63, %68 : vector<8x64xf32>
    %c0_47 = arith.constant 0 : index
    %c0_48 = arith.constant 0 : index
    %70 = vector.load %arg11[%c0_47, %c0_48] : memref<8x64xf32, #tpu.memory_space<vmem>>, vector<8x64xf32>
    tpu.vector_store %arg11[%c0_47, %c0_48], %67 {strides = array<i32>} : memref<8x64xf32, #tpu.memory_space<vmem>>, vector<8x64xf32>,
    %c0_49 = arith.constant 0 : index
    %c0_50 = arith.constant 0 : index
    %71 = vector.load %arg10[%c0_49, %c0_50] : memref<8x64xf32, #tpu.memory_space<vmem>>, vector<8x64xf32>
    tpu.vector_store %arg10[%c0_49, %c0_50], %69 {strides = array<i32>} : memref<8x64xf32, #tpu.memory_space<vmem>>, vector<8x64xf32>,
    %c0_51 = arith.constant 0 : index
    %c0_52 = arith.constant 0 : index
    %72 = vector.load %arg12[%c0_51, %c0_52] : memref<8x64xf32, #tpu.memory_space<vmem>>, vector<8x64xf32>
    %73 = arith.addf %72, %69 : vector<8x64xf32>
    %c0_53 = arith.constant 0 : index
    %c0_54 = arith.constant 0 : index
    %74 = vector.load %arg12[%c0_53, %c0_54] : memref<8x64xf32, #tpu.memory_space<vmem>>, vector<8x64xf32>
    tpu.vector_store %arg12[%c0_53, %c0_54], %73 {strides = array<i32>} : memref<8x64xf32, #tpu.memory_space<vmem>>, vector<8x64xf32>,
    %c2_i32 = arith.constant 2 : i32
    %c8_i32_55 = arith.constant 8 : i32
    %75 = arith.muli %c2_i32, %c8_i32_55 : i32
    %76 = arith.index_cast %75 : i32 to index
    %c0_56 = arith.constant 0 : index
    %77 = vector.load %arg9[%76, %c0_56] : memref<112x256xf32, #tpu.memory_space<vmem>>, vector<8x256xf32>
    %c0_57 = arith.constant 0 : index
    %c0_58 = arith.constant 0 : index
    %78 = vector.load %arg10[%c0_57, %c0_58] : memref<8x64xf32, #tpu.memory_space<vmem>>, vector<8x64xf32>
    %cst_59 = arith.constant dense<0.000000e+00> : vector<8x256xf32>
    %79 = tpu.matmul %78, %20, %cst_59 {dimension_numbers = #tpu.dot_dimension_numbers<[1], [0], [0], [1], [0, 0, 1, 1], [], []>} : vector<8x64xf32>, vector<64x256xf32>, vector<8x256xf32> -> vector<8x256xf32>
    %80 = arith.addf %77, %79 : vector<8x256xf32>
    %81 = arith.negf %80 : vector<8x256xf32>
    %82 = math.exp %81 : vector<8x256xf32>
    %cst_60 = arith.constant 1.000000e+00 : f32
    %83 = vector.broadcast %cst_60 : f32 to vector<8x256xf32>
    %84 = arith.addf %83, %82 : vector<8x256xf32>
    %85 = arith.divf %83, %84 : vector<8x256xf32>
    %86 = vector.extract_strided_slice %85 {offsets = [0, 0], sizes = [8, 64], strides = [1, 1]} : vector<8x256xf32> to vector<8x64xf32>
    %87 = vector.extract_strided_slice %85 {offsets = [0, 64], sizes = [8, 64], strides = [1, 1]} : vector<8x256xf32> to vector<8x64xf32>
    %88 = vector.extract_strided_slice %80 {offsets = [0, 128], sizes = [8, 64], strides = [1, 1]} : vector<8x256xf32> to vector<8x64xf32>
    %89 = math.tanh %88 : vector<8x64xf32>
    %90 = vector.extract_strided_slice %85 {offsets = [0, 192], sizes = [8, 64], strides = [1, 1]} : vector<8x256xf32> to vector<8x64xf32>
    %c0_61 = arith.constant 0 : index
    %c0_62 = arith.constant 0 : index
    %91 = vector.load %arg11[%c0_61, %c0_62] : memref<8x64xf32, #tpu.memory_space<vmem>>, vector<8x64xf32>
    %92 = arith.mulf %87, %91 : vector<8x64xf32>
    %93 = arith.mulf %86, %89 : vector<8x64xf32>
    %94 = arith.addf %92, %93 : vector<8x64xf32>
    %95 = math.tanh %94 : vector<8x64xf32>
    %96 = arith.mulf %90, %95 : vector<8x64xf32>
    %c0_63 = arith.constant 0 : index
    %c0_64 = arith.constant 0 : index
    %97 = vector.load %arg11[%c0_63, %c0_64] : memref<8x64xf32, #tpu.memory_space<vmem>>, vector<8x64xf32>
    tpu.vector_store %arg11[%c0_63, %c0_64], %94 {strides = array<i32>} : memref<8x64xf32, #tpu.memory_space<vmem>>, vector<8x64xf32>,
    %c0_65 = arith.constant 0 : index
    %c0_66 = arith.constant 0 : index
    %98 = vector.load %arg10[%c0_65, %c0_66] : memref<8x64xf32, #tpu.memory_space<vmem>>, vector<8x64xf32>
    tpu.vector_store %arg10[%c0_65, %c0_66], %96 {strides = array<i32>} : memref<8x64xf32, #tpu.memory_space<vmem>>, vector<8x64xf32>,
    %c0_67 = arith.constant 0 : index
    %c0_68 = arith.constant 0 : index
    %99 = vector.load %arg12[%c0_67, %c0_68] : memref<8x64xf32, #tpu.memory_space<vmem>>, vector<8x64xf32>
    %100 = arith.addf %99, %96 : vector<8x64xf32>
    %c0_69 = arith.constant 0 : index
    %c0_70 = arith.constant 0 : index
    %101 = vector.load %arg12[%c0_69, %c0_70] : memref<8x64xf32, #tpu.memory_space<vmem>>, vector<8x64xf32>
    tpu.vector_store %arg12[%c0_69, %c0_70], %100 {strides = array<i32>} : memref<8x64xf32, #tpu.memory_space<vmem>>, vector<8x64xf32>,
    %c3_i32 = arith.constant 3 : i32
    %c8_i32_71 = arith.constant 8 : i32
    %102 = arith.muli %c3_i32, %c8_i32_71 : i32
    %103 = arith.index_cast %102 : i32 to index
    %c0_72 = arith.constant 0 : index
    %104 = vector.load %arg9[%103, %c0_72] : memref<112x256xf32, #tpu.memory_space<vmem>>, vector<8x256xf32>
    %c0_73 = arith.constant 0 : index
    %c0_74 = arith.constant 0 : index
    %105 = vector.load %arg10[%c0_73, %c0_74] : memref<8x64xf32, #tpu.memory_space<vmem>>, vector<8x64xf32>
    %cst_75 = arith.constant dense<0.000000e+00> : vector<8x256xf32>
    %106 = tpu.matmul %105, %20, %cst_75 {dimension_numbers = #tpu.dot_dimension_numbers<[1], [0], [0], [1], [0, 0, 1, 1], [], []>} : vector<8x64xf32>, vector<64x256xf32>, vector<8x256xf32> -> vector<8x256xf32>
    %107 = arith.addf %104, %106 : vector<8x256xf32>
    %108 = arith.negf %107 : vector<8x256xf32>
    %109 = math.exp %108 : vector<8x256xf32>
    %cst_76 = arith.constant 1.000000e+00 : f32
    %110 = vector.broadcast %cst_76 : f32 to vector<8x256xf32>
    %111 = arith.addf %110, %109 : vector<8x256xf32>
    %112 = arith.divf %110, %111 : vector<8x256xf32>
    %113 = vector.extract_strided_slice %112 {offsets = [0, 0], sizes = [8, 64], strides = [1, 1]} : vector<8x256xf32> to vector<8x64xf32>
    %114 = vector.extract_strided_slice %112 {offsets = [0, 64], sizes = [8, 64], strides = [1, 1]} : vector<8x256xf32> to vector<8x64xf32>
    %115 = vector.extract_strided_slice %107 {offsets = [0, 128], sizes = [8, 64], strides = [1, 1]} : vector<8x256xf32> to vector<8x64xf32>
    %116 = math.tanh %115 : vector<8x64xf32>
    %117 = vector.extract_strided_slice %112 {offsets = [0, 192], sizes = [8, 64], strides = [1, 1]} : vector<8x256xf32> to vector<8x64xf32>
    %c0_77 = arith.constant 0 : index
    %c0_78 = arith.constant 0 : index
    %118 = vector.load %arg11[%c0_77, %c0_78] : memref<8x64xf32, #tpu.memory_space<vmem>>, vector<8x64xf32>
    %119 = arith.mulf %114, %118 : vector<8x64xf32>
    %120 = arith.mulf %113, %116 : vector<8x64xf32>
    %121 = arith.addf %119, %120 : vector<8x64xf32>
    %122 = math.tanh %121 : vector<8x64xf32>
    %123 = arith.mulf %117, %122 : vector<8x64xf32>
    %c0_79 = arith.constant 0 : index
    %c0_80 = arith.constant 0 : index
    %124 = vector.load %arg11[%c0_79, %c0_80] : memref<8x64xf32, #tpu.memory_space<vmem>>, vector<8x64xf32>
    tpu.vector_store %arg11[%c0_79, %c0_80], %121 {strides = array<i32>} : memref<8x64xf32, #tpu.memory_space<vmem>>, vector<8x64xf32>,
    %c0_81 = arith.constant 0 : index
    %c0_82 = arith.constant 0 : index
    %125 = vector.load %arg10[%c0_81, %c0_82] : memref<8x64xf32, #tpu.memory_space<vmem>>, vector<8x64xf32>
    tpu.vector_store %arg10[%c0_81, %c0_82], %123 {strides = array<i32>} : memref<8x64xf32, #tpu.memory_space<vmem>>, vector<8x64xf32>,
    %c0_83 = arith.constant 0 : index
    %c0_84 = arith.constant 0 : index
    %126 = vector.load %arg12[%c0_83, %c0_84] : memref<8x64xf32, #tpu.memory_space<vmem>>, vector<8x64xf32>
    %127 = arith.addf %126, %123 : vector<8x64xf32>
    %c0_85 = arith.constant 0 : index
    %c0_86 = arith.constant 0 : index
    %128 = vector.load %arg12[%c0_85, %c0_86] : memref<8x64xf32, #tpu.memory_space<vmem>>, vector<8x64xf32>
    tpu.vector_store %arg12[%c0_85, %c0_86], %127 {strides = array<i32>} : memref<8x64xf32, #tpu.memory_space<vmem>>, vector<8x64xf32>,
    %c4_i32 = arith.constant 4 : i32
    %c8_i32_87 = arith.constant 8 : i32
    %129 = arith.muli %c4_i32, %c8_i32_87 : i32
    %130 = arith.index_cast %129 : i32 to index
    %c0_88 = arith.constant 0 : index
    %131 = vector.load %arg9[%130, %c0_88] : memref<112x256xf32, #tpu.memory_space<vmem>>, vector<8x256xf32>
    %c0_89 = arith.constant 0 : index
    %c0_90 = arith.constant 0 : index
    %132 = vector.load %arg10[%c0_89, %c0_90] : memref<8x64xf32, #tpu.memory_space<vmem>>, vector<8x64xf32>
    %cst_91 = arith.constant dense<0.000000e+00> : vector<8x256xf32>
    %133 = tpu.matmul %132, %20, %cst_91 {dimension_numbers = #tpu.dot_dimension_numbers<[1], [0], [0], [1], [0, 0, 1, 1], [], []>} : vector<8x64xf32>, vector<64x256xf32>, vector<8x256xf32> -> vector<8x256xf32>
    %134 = arith.addf %131, %133 : vector<8x256xf32>
    %135 = arith.negf %134 : vector<8x256xf32>
    %136 = math.exp %135 : vector<8x256xf32>
    %cst_92 = arith.constant 1.000000e+00 : f32
    %137 = vector.broadcast %cst_92 : f32 to vector<8x256xf32>
    %138 = arith.addf %137, %136 : vector<8x256xf32>
    %139 = arith.divf %137, %138 : vector<8x256xf32>
    %140 = vector.extract_strided_slice %139 {offsets = [0, 0], sizes = [8, 64], strides = [1, 1]} : vector<8x256xf32> to vector<8x64xf32>
    %141 = vector.extract_strided_slice %139 {offsets = [0, 64], sizes = [8, 64], strides = [1, 1]} : vector<8x256xf32> to vector<8x64xf32>
    %142 = vector.extract_strided_slice %134 {offsets = [0, 128], sizes = [8, 64], strides = [1, 1]} : vector<8x256xf32> to vector<8x64xf32>
    %143 = math.tanh %142 : vector<8x64xf32>
    %144 = vector.extract_strided_slice %139 {offsets = [0, 192], sizes = [8, 64], strides = [1, 1]} : vector<8x256xf32> to vector<8x64xf32>
    %c0_93 = arith.constant 0 : index
    %c0_94 = arith.constant 0 : index
    %145 = vector.load %arg11[%c0_93, %c0_94] : memref<8x64xf32, #tpu.memory_space<vmem>>, vector<8x64xf32>
    %146 = arith.mulf %141, %145 : vector<8x64xf32>
    %147 = arith.mulf %140, %143 : vector<8x64xf32>
    %148 = arith.addf %146, %147 : vector<8x64xf32>
    %149 = math.tanh %148 : vector<8x64xf32>
    %150 = arith.mulf %144, %149 : vector<8x64xf32>
    %c0_95 = arith.constant 0 : index
    %c0_96 = arith.constant 0 : index
    %151 = vector.load %arg11[%c0_95, %c0_96] : memref<8x64xf32, #tpu.memory_space<vmem>>, vector<8x64xf32>
    tpu.vector_store %arg11[%c0_95, %c0_96], %148 {strides = array<i32>} : memref<8x64xf32, #tpu.memory_space<vmem>>, vector<8x64xf32>,
    %c0_97 = arith.constant 0 : index
    %c0_98 = arith.constant 0 : index
    %152 = vector.load %arg10[%c0_97, %c0_98] : memref<8x64xf32, #tpu.memory_space<vmem>>, vector<8x64xf32>
    tpu.vector_store %arg10[%c0_97, %c0_98], %150 {strides = array<i32>} : memref<8x64xf32, #tpu.memory_space<vmem>>, vector<8x64xf32>,
    %c0_99 = arith.constant 0 : index
    %c0_100 = arith.constant 0 : index
    %153 = vector.load %arg12[%c0_99, %c0_100] : memref<8x64xf32, #tpu.memory_space<vmem>>, vector<8x64xf32>
    %154 = arith.addf %153, %150 : vector<8x64xf32>
    %c0_101 = arith.constant 0 : index
    %c0_102 = arith.constant 0 : index
    %155 = vector.load %arg12[%c0_101, %c0_102] : memref<8x64xf32, #tpu.memory_space<vmem>>, vector<8x64xf32>
    tpu.vector_store %arg12[%c0_101, %c0_102], %154 {strides = array<i32>} : memref<8x64xf32, #tpu.memory_space<vmem>>, vector<8x64xf32>,
    %c5_i32 = arith.constant 5 : i32
    %c8_i32_103 = arith.constant 8 : i32
    %156 = arith.muli %c5_i32, %c8_i32_103 : i32
    %157 = arith.index_cast %156 : i32 to index
    %c0_104 = arith.constant 0 : index
    %158 = vector.load %arg9[%157, %c0_104] : memref<112x256xf32, #tpu.memory_space<vmem>>, vector<8x256xf32>
    %c0_105 = arith.constant 0 : index
    %c0_106 = arith.constant 0 : index
    %159 = vector.load %arg10[%c0_105, %c0_106] : memref<8x64xf32, #tpu.memory_space<vmem>>, vector<8x64xf32>
    %cst_107 = arith.constant dense<0.000000e+00> : vector<8x256xf32>
    %160 = tpu.matmul %159, %20, %cst_107 {dimension_numbers = #tpu.dot_dimension_numbers<[1], [0], [0], [1], [0, 0, 1, 1], [], []>} : vector<8x64xf32>, vector<64x256xf32>, vector<8x256xf32> -> vector<8x256xf32>
    %161 = arith.addf %158, %160 : vector<8x256xf32>
    %162 = arith.negf %161 : vector<8x256xf32>
    %163 = math.exp %162 : vector<8x256xf32>
    %cst_108 = arith.constant 1.000000e+00 : f32
    %164 = vector.broadcast %cst_108 : f32 to vector<8x256xf32>
    %165 = arith.addf %164, %163 : vector<8x256xf32>
    %166 = arith.divf %164, %165 : vector<8x256xf32>
    %167 = vector.extract_strided_slice %166 {offsets = [0, 0], sizes = [8, 64], strides = [1, 1]} : vector<8x256xf32> to vector<8x64xf32>
    %168 = vector.extract_strided_slice %166 {offsets = [0, 64], sizes = [8, 64], strides = [1, 1]} : vector<8x256xf32> to vector<8x64xf32>
    %169 = vector.extract_strided_slice %161 {offsets = [0, 128], sizes = [8, 64], strides = [1, 1]} : vector<8x256xf32> to vector<8x64xf32>
    %170 = math.tanh %169 : vector<8x64xf32>
    %171 = vector.extract_strided_slice %166 {offsets = [0, 192], sizes = [8, 64], strides = [1, 1]} : vector<8x256xf32> to vector<8x64xf32>
    %c0_109 = arith.constant 0 : index
    %c0_110 = arith.constant 0 : index
    %172 = vector.load %arg11[%c0_109, %c0_110] : memref<8x64xf32, #tpu.memory_space<vmem>>, vector<8x64xf32>
    %173 = arith.mulf %168, %172 : vector<8x64xf32>
    %174 = arith.mulf %167, %170 : vector<8x64xf32>
    %175 = arith.addf %173, %174 : vector<8x64xf32>
    %176 = math.tanh %175 : vector<8x64xf32>
    %177 = arith.mulf %171, %176 : vector<8x64xf32>
    %c0_111 = arith.constant 0 : index
    %c0_112 = arith.constant 0 : index
    %178 = vector.load %arg11[%c0_111, %c0_112] : memref<8x64xf32, #tpu.memory_space<vmem>>, vector<8x64xf32>
    tpu.vector_store %arg11[%c0_111, %c0_112], %175 {strides = array<i32>} : memref<8x64xf32, #tpu.memory_space<vmem>>, vector<8x64xf32>,
    %c0_113 = arith.constant 0 : index
    %c0_114 = arith.constant 0 : index
    %179 = vector.load %arg10[%c0_113, %c0_114] : memref<8x64xf32, #tpu.memory_space<vmem>>, vector<8x64xf32>
    tpu.vector_store %arg10[%c0_113, %c0_114], %177 {strides = array<i32>} : memref<8x64xf32, #tpu.memory_space<vmem>>, vector<8x64xf32>,
    %c0_115 = arith.constant 0 : index
    %c0_116 = arith.constant 0 : index
    %180 = vector.load %arg12[%c0_115, %c0_116] : memref<8x64xf32, #tpu.memory_space<vmem>>, vector<8x64xf32>
    %181 = arith.addf %180, %177 : vector<8x64xf32>
    %c0_117 = arith.constant 0 : index
    %c0_118 = arith.constant 0 : index
    %182 = vector.load %arg12[%c0_117, %c0_118] : memref<8x64xf32, #tpu.memory_space<vmem>>, vector<8x64xf32>
    tpu.vector_store %arg12[%c0_117, %c0_118], %181 {strides = array<i32>} : memref<8x64xf32, #tpu.memory_space<vmem>>, vector<8x64xf32>,
    %c6_i32 = arith.constant 6 : i32
    %c8_i32_119 = arith.constant 8 : i32
    %183 = arith.muli %c6_i32, %c8_i32_119 : i32
    %184 = arith.index_cast %183 : i32 to index
    %c0_120 = arith.constant 0 : index
    %185 = vector.load %arg9[%184, %c0_120] : memref<112x256xf32, #tpu.memory_space<vmem>>, vector<8x256xf32>
    %c0_121 = arith.constant 0 : index
    %c0_122 = arith.constant 0 : index
    %186 = vector.load %arg10[%c0_121, %c0_122] : memref<8x64xf32, #tpu.memory_space<vmem>>, vector<8x64xf32>
    %cst_123 = arith.constant dense<0.000000e+00> : vector<8x256xf32>
    %187 = tpu.matmul %186, %20, %cst_123 {dimension_numbers = #tpu.dot_dimension_numbers<[1], [0], [0], [1], [0, 0, 1, 1], [], []>} : vector<8x64xf32>, vector<64x256xf32>, vector<8x256xf32> -> vector<8x256xf32>
    %188 = arith.addf %185, %187 : vector<8x256xf32>
    %189 = arith.negf %188 : vector<8x256xf32>
    %190 = math.exp %189 : vector<8x256xf32>
    %cst_124 = arith.constant 1.000000e+00 : f32
    %191 = vector.broadcast %cst_124 : f32 to vector<8x256xf32>
    %192 = arith.addf %191, %190 : vector<8x256xf32>
    %193 = arith.divf %191, %192 : vector<8x256xf32>
    %194 = vector.extract_strided_slice %193 {offsets = [0, 0], sizes = [8, 64], strides = [1, 1]} : vector<8x256xf32> to vector<8x64xf32>
    %195 = vector.extract_strided_slice %193 {offsets = [0, 64], sizes = [8, 64], strides = [1, 1]} : vector<8x256xf32> to vector<8x64xf32>
    %196 = vector.extract_strided_slice %188 {offsets = [0, 128], sizes = [8, 64], strides = [1, 1]} : vector<8x256xf32> to vector<8x64xf32>
    %197 = math.tanh %196 : vector<8x64xf32>
    %198 = vector.extract_strided_slice %193 {offsets = [0, 192], sizes = [8, 64], strides = [1, 1]} : vector<8x256xf32> to vector<8x64xf32>
    %c0_125 = arith.constant 0 : index
    %c0_126 = arith.constant 0 : index
    %199 = vector.load %arg11[%c0_125, %c0_126] : memref<8x64xf32, #tpu.memory_space<vmem>>, vector<8x64xf32>
    %200 = arith.mulf %195, %199 : vector<8x64xf32>
    %201 = arith.mulf %194, %197 : vector<8x64xf32>
    %202 = arith.addf %200, %201 : vector<8x64xf32>
    %203 = math.tanh %202 : vector<8x64xf32>
    %204 = arith.mulf %198, %203 : vector<8x64xf32>
    %c0_127 = arith.constant 0 : index
    %c0_128 = arith.constant 0 : index
    %205 = vector.load %arg11[%c0_127, %c0_128] : memref<8x64xf32, #tpu.memory_space<vmem>>, vector<8x64xf32>
    tpu.vector_store %arg11[%c0_127, %c0_128], %202 {strides = array<i32>} : memref<8x64xf32, #tpu.memory_space<vmem>>, vector<8x64xf32>,
    %c0_129 = arith.constant 0 : index
    %c0_130 = arith.constant 0 : index
    %206 = vector.load %arg10[%c0_129, %c0_130] : memref<8x64xf32, #tpu.memory_space<vmem>>, vector<8x64xf32>
    tpu.vector_store %arg10[%c0_129, %c0_130], %204 {strides = array<i32>} : memref<8x64xf32, #tpu.memory_space<vmem>>, vector<8x64xf32>,
    %c0_131 = arith.constant 0 : index
    %c0_132 = arith.constant 0 : index
    %207 = vector.load %arg12[%c0_131, %c0_132] : memref<8x64xf32, #tpu.memory_space<vmem>>, vector<8x64xf32>
    %208 = arith.addf %207, %204 : vector<8x64xf32>
    %c0_133 = arith.constant 0 : index
    %c0_134 = arith.constant 0 : index
    %209 = vector.load %arg12[%c0_133, %c0_134] : memref<8x64xf32, #tpu.memory_space<vmem>>, vector<8x64xf32>
    tpu.vector_store %arg12[%c0_133, %c0_134], %208 {strides = array<i32>} : memref<8x64xf32, #tpu.memory_space<vmem>>, vector<8x64xf32>,
    %c7_i32 = arith.constant 7 : i32
    %c8_i32_135 = arith.constant 8 : i32
    %210 = arith.muli %c7_i32, %c8_i32_135 : i32
    %211 = arith.index_cast %210 : i32 to index
    %c0_136 = arith.constant 0 : index
    %212 = vector.load %arg9[%211, %c0_136] : memref<112x256xf32, #tpu.memory_space<vmem>>, vector<8x256xf32>
    %c0_137 = arith.constant 0 : index
    %c0_138 = arith.constant 0 : index
    %213 = vector.load %arg10[%c0_137, %c0_138] : memref<8x64xf32, #tpu.memory_space<vmem>>, vector<8x64xf32>
    %cst_139 = arith.constant dense<0.000000e+00> : vector<8x256xf32>
    %214 = tpu.matmul %213, %20, %cst_139 {dimension_numbers = #tpu.dot_dimension_numbers<[1], [0], [0], [1], [0, 0, 1, 1], [], []>} : vector<8x64xf32>, vector<64x256xf32>, vector<8x256xf32> -> vector<8x256xf32>
    %215 = arith.addf %212, %214 : vector<8x256xf32>
    %216 = arith.negf %215 : vector<8x256xf32>
    %217 = math.exp %216 : vector<8x256xf32>
    %cst_140 = arith.constant 1.000000e+00 : f32
    %218 = vector.broadcast %cst_140 : f32 to vector<8x256xf32>
    %219 = arith.addf %218, %217 : vector<8x256xf32>
    %220 = arith.divf %218, %219 : vector<8x256xf32>
    %221 = vector.extract_strided_slice %220 {offsets = [0, 0], sizes = [8, 64], strides = [1, 1]} : vector<8x256xf32> to vector<8x64xf32>
    %222 = vector.extract_strided_slice %220 {offsets = [0, 64], sizes = [8, 64], strides = [1, 1]} : vector<8x256xf32> to vector<8x64xf32>
    %223 = vector.extract_strided_slice %215 {offsets = [0, 128], sizes = [8, 64], strides = [1, 1]} : vector<8x256xf32> to vector<8x64xf32>
    %224 = math.tanh %223 : vector<8x64xf32>
    %225 = vector.extract_strided_slice %220 {offsets = [0, 192], sizes = [8, 64], strides = [1, 1]} : vector<8x256xf32> to vector<8x64xf32>
    %c0_141 = arith.constant 0 : index
    %c0_142 = arith.constant 0 : index
    %226 = vector.load %arg11[%c0_141, %c0_142] : memref<8x64xf32, #tpu.memory_space<vmem>>, vector<8x64xf32>
    %227 = arith.mulf %222, %226 : vector<8x64xf32>
    %228 = arith.mulf %221, %224 : vector<8x64xf32>
    %229 = arith.addf %227, %228 : vector<8x64xf32>
    %230 = math.tanh %229 : vector<8x64xf32>
    %231 = arith.mulf %225, %230 : vector<8x64xf32>
    %c0_143 = arith.constant 0 : index
    %c0_144 = arith.constant 0 : index
    %232 = vector.load %arg11[%c0_143, %c0_144] : memref<8x64xf32, #tpu.memory_space<vmem>>, vector<8x64xf32>
    tpu.vector_store %arg11[%c0_143, %c0_144], %229 {strides = array<i32>} : memref<8x64xf32, #tpu.memory_space<vmem>>, vector<8x64xf32>,
    %c0_145 = arith.constant 0 : index
    %c0_146 = arith.constant 0 : index
    %233 = vector.load %arg10[%c0_145, %c0_146] : memref<8x64xf32, #tpu.memory_space<vmem>>, vector<8x64xf32>
    tpu.vector_store %arg10[%c0_145, %c0_146], %231 {strides = array<i32>} : memref<8x64xf32, #tpu.memory_space<vmem>>, vector<8x64xf32>,
    %c0_147 = arith.constant 0 : index
    %c0_148 = arith.constant 0 : index
    %234 = vector.load %arg12[%c0_147, %c0_148] : memref<8x64xf32, #tpu.memory_space<vmem>>, vector<8x64xf32>
    %235 = arith.addf %234, %231 : vector<8x64xf32>
    %c0_149 = arith.constant 0 : index
    %c0_150 = arith.constant 0 : index
    %236 = vector.load %arg12[%c0_149, %c0_150] : memref<8x64xf32, #tpu.memory_space<vmem>>, vector<8x64xf32>
    tpu.vector_store %arg12[%c0_149, %c0_150], %235 {strides = array<i32>} : memref<8x64xf32, #tpu.memory_space<vmem>>, vector<8x64xf32>,
    %c8_i32_151 = arith.constant 8 : i32
    %c8_i32_152 = arith.constant 8 : i32
    %237 = arith.muli %c8_i32_151, %c8_i32_152 : i32
    %238 = arith.index_cast %237 : i32 to index
    %c0_153 = arith.constant 0 : index
    %239 = vector.load %arg9[%238, %c0_153] : memref<112x256xf32, #tpu.memory_space<vmem>>, vector<8x256xf32>
    %c0_154 = arith.constant 0 : index
    %c0_155 = arith.constant 0 : index
    %240 = vector.load %arg10[%c0_154, %c0_155] : memref<8x64xf32, #tpu.memory_space<vmem>>, vector<8x64xf32>
    %cst_156 = arith.constant dense<0.000000e+00> : vector<8x256xf32>
    %241 = tpu.matmul %240, %20, %cst_156 {dimension_numbers = #tpu.dot_dimension_numbers<[1], [0], [0], [1], [0, 0, 1, 1], [], []>} : vector<8x64xf32>, vector<64x256xf32>, vector<8x256xf32> -> vector<8x256xf32>
    %242 = arith.addf %239, %241 : vector<8x256xf32>
    %243 = arith.negf %242 : vector<8x256xf32>
    %244 = math.exp %243 : vector<8x256xf32>
    %cst_157 = arith.constant 1.000000e+00 : f32
    %245 = vector.broadcast %cst_157 : f32 to vector<8x256xf32>
    %246 = arith.addf %245, %244 : vector<8x256xf32>
    %247 = arith.divf %245, %246 : vector<8x256xf32>
    %248 = vector.extract_strided_slice %247 {offsets = [0, 0], sizes = [8, 64], strides = [1, 1]} : vector<8x256xf32> to vector<8x64xf32>
    %249 = vector.extract_strided_slice %247 {offsets = [0, 64], sizes = [8, 64], strides = [1, 1]} : vector<8x256xf32> to vector<8x64xf32>
    %250 = vector.extract_strided_slice %242 {offsets = [0, 128], sizes = [8, 64], strides = [1, 1]} : vector<8x256xf32> to vector<8x64xf32>
    %251 = math.tanh %250 : vector<8x64xf32>
    %252 = vector.extract_strided_slice %247 {offsets = [0, 192], sizes = [8, 64], strides = [1, 1]} : vector<8x256xf32> to vector<8x64xf32>
    %c0_158 = arith.constant 0 : index
    %c0_159 = arith.constant 0 : index
    %253 = vector.load %arg11[%c0_158, %c0_159] : memref<8x64xf32, #tpu.memory_space<vmem>>, vector<8x64xf32>
    %254 = arith.mulf %249, %253 : vector<8x64xf32>
    %255 = arith.mulf %248, %251 : vector<8x64xf32>
    %256 = arith.addf %254, %255 : vector<8x64xf32>
    %257 = math.tanh %256 : vector<8x64xf32>
    %258 = arith.mulf %252, %257 : vector<8x64xf32>
    %c0_160 = arith.constant 0 : index
    %c0_161 = arith.constant 0 : index
    %259 = vector.load %arg11[%c0_160, %c0_161] : memref<8x64xf32, #tpu.memory_space<vmem>>, vector<8x64xf32>
    tpu.vector_store %arg11[%c0_160, %c0_161], %256 {strides = array<i32>} : memref<8x64xf32, #tpu.memory_space<vmem>>, vector<8x64xf32>,
    %c0_162 = arith.constant 0 : index
    %c0_163 = arith.constant 0 : index
    %260 = vector.load %arg10[%c0_162, %c0_163] : memref<8x64xf32, #tpu.memory_space<vmem>>, vector<8x64xf32>
    tpu.vector_store %arg10[%c0_162, %c0_163], %258 {strides = array<i32>} : memref<8x64xf32, #tpu.memory_space<vmem>>, vector<8x64xf32>,
    %c0_164 = arith.constant 0 : index
    %c0_165 = arith.constant 0 : index
    %261 = vector.load %arg12[%c0_164, %c0_165] : memref<8x64xf32, #tpu.memory_space<vmem>>, vector<8x64xf32>
    %262 = arith.addf %261, %258 : vector<8x64xf32>
    %c0_166 = arith.constant 0 : index
    %c0_167 = arith.constant 0 : index
    %263 = vector.load %arg12[%c0_166, %c0_167] : memref<8x64xf32, #tpu.memory_space<vmem>>, vector<8x64xf32>
    tpu.vector_store %arg12[%c0_166, %c0_167], %262 {strides = array<i32>} : memref<8x64xf32, #tpu.memory_space<vmem>>, vector<8x64xf32>,
    %c9_i32 = arith.constant 9 : i32
    %c8_i32_168 = arith.constant 8 : i32
    %264 = arith.muli %c9_i32, %c8_i32_168 : i32
    %265 = arith.index_cast %264 : i32 to index
    %c0_169 = arith.constant 0 : index
    %266 = vector.load %arg9[%265, %c0_169] : memref<112x256xf32, #tpu.memory_space<vmem>>, vector<8x256xf32>
    %c0_170 = arith.constant 0 : index
    %c0_171 = arith.constant 0 : index
    %267 = vector.load %arg10[%c0_170, %c0_171] : memref<8x64xf32, #tpu.memory_space<vmem>>, vector<8x64xf32>
    %cst_172 = arith.constant dense<0.000000e+00> : vector<8x256xf32>
    %268 = tpu.matmul %267, %20, %cst_172 {dimension_numbers = #tpu.dot_dimension_numbers<[1], [0], [0], [1], [0, 0, 1, 1], [], []>} : vector<8x64xf32>, vector<64x256xf32>, vector<8x256xf32> -> vector<8x256xf32>
    %269 = arith.addf %266, %268 : vector<8x256xf32>
    %270 = arith.negf %269 : vector<8x256xf32>
    %271 = math.exp %270 : vector<8x256xf32>
    %cst_173 = arith.constant 1.000000e+00 : f32
    %272 = vector.broadcast %cst_173 : f32 to vector<8x256xf32>
    %273 = arith.addf %272, %271 : vector<8x256xf32>
    %274 = arith.divf %272, %273 : vector<8x256xf32>
    %275 = vector.extract_strided_slice %274 {offsets = [0, 0], sizes = [8, 64], strides = [1, 1]} : vector<8x256xf32> to vector<8x64xf32>
    %276 = vector.extract_strided_slice %274 {offsets = [0, 64], sizes = [8, 64], strides = [1, 1]} : vector<8x256xf32> to vector<8x64xf32>
    %277 = vector.extract_strided_slice %269 {offsets = [0, 128], sizes = [8, 64], strides = [1, 1]} : vector<8x256xf32> to vector<8x64xf32>
    %278 = math.tanh %277 : vector<8x64xf32>
    %279 = vector.extract_strided_slice %274 {offsets = [0, 192], sizes = [8, 64], strides = [1, 1]} : vector<8x256xf32> to vector<8x64xf32>
    %c0_174 = arith.constant 0 : index
    %c0_175 = arith.constant 0 : index
    %280 = vector.load %arg11[%c0_174, %c0_175] : memref<8x64xf32, #tpu.memory_space<vmem>>, vector<8x64xf32>
    %281 = arith.mulf %276, %280 : vector<8x64xf32>
    %282 = arith.mulf %275, %278 : vector<8x64xf32>
    %283 = arith.addf %281, %282 : vector<8x64xf32>
    %284 = math.tanh %283 : vector<8x64xf32>
    %285 = arith.mulf %279, %284 : vector<8x64xf32>
    %c0_176 = arith.constant 0 : index
    %c0_177 = arith.constant 0 : index
    %286 = vector.load %arg11[%c0_176, %c0_177] : memref<8x64xf32, #tpu.memory_space<vmem>>, vector<8x64xf32>
    tpu.vector_store %arg11[%c0_176, %c0_177], %283 {strides = array<i32>} : memref<8x64xf32, #tpu.memory_space<vmem>>, vector<8x64xf32>,
    %c0_178 = arith.constant 0 : index
    %c0_179 = arith.constant 0 : index
    %287 = vector.load %arg10[%c0_178, %c0_179] : memref<8x64xf32, #tpu.memory_space<vmem>>, vector<8x64xf32>
    tpu.vector_store %arg10[%c0_178, %c0_179], %285 {strides = array<i32>} : memref<8x64xf32, #tpu.memory_space<vmem>>, vector<8x64xf32>,
    %c0_180 = arith.constant 0 : index
    %c0_181 = arith.constant 0 : index
    %288 = vector.load %arg12[%c0_180, %c0_181] : memref<8x64xf32, #tpu.memory_space<vmem>>, vector<8x64xf32>
    %289 = arith.addf %288, %285 : vector<8x64xf32>
    %c0_182 = arith.constant 0 : index
    %c0_183 = arith.constant 0 : index
    %290 = vector.load %arg12[%c0_182, %c0_183] : memref<8x64xf32, #tpu.memory_space<vmem>>, vector<8x64xf32>
    tpu.vector_store %arg12[%c0_182, %c0_183], %289 {strides = array<i32>} : memref<8x64xf32, #tpu.memory_space<vmem>>, vector<8x64xf32>,
    %c10_i32 = arith.constant 10 : i32
    %c8_i32_184 = arith.constant 8 : i32
    %291 = arith.muli %c10_i32, %c8_i32_184 : i32
    %292 = arith.index_cast %291 : i32 to index
    %c0_185 = arith.constant 0 : index
    %293 = vector.load %arg9[%292, %c0_185] : memref<112x256xf32, #tpu.memory_space<vmem>>, vector<8x256xf32>
    %c0_186 = arith.constant 0 : index
    %c0_187 = arith.constant 0 : index
    %294 = vector.load %arg10[%c0_186, %c0_187] : memref<8x64xf32, #tpu.memory_space<vmem>>, vector<8x64xf32>
    %cst_188 = arith.constant dense<0.000000e+00> : vector<8x256xf32>
    %295 = tpu.matmul %294, %20, %cst_188 {dimension_numbers = #tpu.dot_dimension_numbers<[1], [0], [0], [1], [0, 0, 1, 1], [], []>} : vector<8x64xf32>, vector<64x256xf32>, vector<8x256xf32> -> vector<8x256xf32>
    %296 = arith.addf %293, %295 : vector<8x256xf32>
    %297 = arith.negf %296 : vector<8x256xf32>
    %298 = math.exp %297 : vector<8x256xf32>
    %cst_189 = arith.constant 1.000000e+00 : f32
    %299 = vector.broadcast %cst_189 : f32 to vector<8x256xf32>
    %300 = arith.addf %299, %298 : vector<8x256xf32>
    %301 = arith.divf %299, %300 : vector<8x256xf32>
    %302 = vector.extract_strided_slice %301 {offsets = [0, 0], sizes = [8, 64], strides = [1, 1]} : vector<8x256xf32> to vector<8x64xf32>
    %303 = vector.extract_strided_slice %301 {offsets = [0, 64], sizes = [8, 64], strides = [1, 1]} : vector<8x256xf32> to vector<8x64xf32>
    %304 = vector.extract_strided_slice %296 {offsets = [0, 128], sizes = [8, 64], strides = [1, 1]} : vector<8x256xf32> to vector<8x64xf32>
    %305 = math.tanh %304 : vector<8x64xf32>
    %306 = vector.extract_strided_slice %301 {offsets = [0, 192], sizes = [8, 64], strides = [1, 1]} : vector<8x256xf32> to vector<8x64xf32>
    %c0_190 = arith.constant 0 : index
    %c0_191 = arith.constant 0 : index
    %307 = vector.load %arg11[%c0_190, %c0_191] : memref<8x64xf32, #tpu.memory_space<vmem>>, vector<8x64xf32>
    %308 = arith.mulf %303, %307 : vector<8x64xf32>
    %309 = arith.mulf %302, %305 : vector<8x64xf32>
    %310 = arith.addf %308, %309 : vector<8x64xf32>
    %311 = math.tanh %310 : vector<8x64xf32>
    %312 = arith.mulf %306, %311 : vector<8x64xf32>
    %c0_192 = arith.constant 0 : index
    %c0_193 = arith.constant 0 : index
    %313 = vector.load %arg11[%c0_192, %c0_193] : memref<8x64xf32, #tpu.memory_space<vmem>>, vector<8x64xf32>
    tpu.vector_store %arg11[%c0_192, %c0_193], %310 {strides = array<i32>} : memref<8x64xf32, #tpu.memory_space<vmem>>, vector<8x64xf32>,
    %c0_194 = arith.constant 0 : index
    %c0_195 = arith.constant 0 : index
    %314 = vector.load %arg10[%c0_194, %c0_195] : memref<8x64xf32, #tpu.memory_space<vmem>>, vector<8x64xf32>
    tpu.vector_store %arg10[%c0_194, %c0_195], %312 {strides = array<i32>} : memref<8x64xf32, #tpu.memory_space<vmem>>, vector<8x64xf32>,
    %c0_196 = arith.constant 0 : index
    %c0_197 = arith.constant 0 : index
    %315 = vector.load %arg12[%c0_196, %c0_197] : memref<8x64xf32, #tpu.memory_space<vmem>>, vector<8x64xf32>
    %316 = arith.addf %315, %312 : vector<8x64xf32>
    %c0_198 = arith.constant 0 : index
    %c0_199 = arith.constant 0 : index
    %317 = vector.load %arg12[%c0_198, %c0_199] : memref<8x64xf32, #tpu.memory_space<vmem>>, vector<8x64xf32>
    tpu.vector_store %arg12[%c0_198, %c0_199], %316 {strides = array<i32>} : memref<8x64xf32, #tpu.memory_space<vmem>>, vector<8x64xf32>,
    %c11_i32 = arith.constant 11 : i32
    %c8_i32_200 = arith.constant 8 : i32
    %318 = arith.muli %c11_i32, %c8_i32_200 : i32
    %319 = arith.index_cast %318 : i32 to index
    %c0_201 = arith.constant 0 : index
    %320 = vector.load %arg9[%319, %c0_201] : memref<112x256xf32, #tpu.memory_space<vmem>>, vector<8x256xf32>
    %c0_202 = arith.constant 0 : index
    %c0_203 = arith.constant 0 : index
    %321 = vector.load %arg10[%c0_202, %c0_203] : memref<8x64xf32, #tpu.memory_space<vmem>>, vector<8x64xf32>
    %cst_204 = arith.constant dense<0.000000e+00> : vector<8x256xf32>
    %322 = tpu.matmul %321, %20, %cst_204 {dimension_numbers = #tpu.dot_dimension_numbers<[1], [0], [0], [1], [0, 0, 1, 1], [], []>} : vector<8x64xf32>, vector<64x256xf32>, vector<8x256xf32> -> vector<8x256xf32>
    %323 = arith.addf %320, %322 : vector<8x256xf32>
    %324 = arith.negf %323 : vector<8x256xf32>
    %325 = math.exp %324 : vector<8x256xf32>
    %cst_205 = arith.constant 1.000000e+00 : f32
    %326 = vector.broadcast %cst_205 : f32 to vector<8x256xf32>
    %327 = arith.addf %326, %325 : vector<8x256xf32>
    %328 = arith.divf %326, %327 : vector<8x256xf32>
    %329 = vector.extract_strided_slice %328 {offsets = [0, 0], sizes = [8, 64], strides = [1, 1]} : vector<8x256xf32> to vector<8x64xf32>
    %330 = vector.extract_strided_slice %328 {offsets = [0, 64], sizes = [8, 64], strides = [1, 1]} : vector<8x256xf32> to vector<8x64xf32>
    %331 = vector.extract_strided_slice %323 {offsets = [0, 128], sizes = [8, 64], strides = [1, 1]} : vector<8x256xf32> to vector<8x64xf32>
    %332 = math.tanh %331 : vector<8x64xf32>
    %333 = vector.extract_strided_slice %328 {offsets = [0, 192], sizes = [8, 64], strides = [1, 1]} : vector<8x256xf32> to vector<8x64xf32>
    %c0_206 = arith.constant 0 : index
    %c0_207 = arith.constant 0 : index
    %334 = vector.load %arg11[%c0_206, %c0_207] : memref<8x64xf32, #tpu.memory_space<vmem>>, vector<8x64xf32>
    %335 = arith.mulf %330, %334 : vector<8x64xf32>
    %336 = arith.mulf %329, %332 : vector<8x64xf32>
    %337 = arith.addf %335, %336 : vector<8x64xf32>
    %338 = math.tanh %337 : vector<8x64xf32>
    %339 = arith.mulf %333, %338 : vector<8x64xf32>
    %c0_208 = arith.constant 0 : index
    %c0_209 = arith.constant 0 : index
    %340 = vector.load %arg11[%c0_208, %c0_209] : memref<8x64xf32, #tpu.memory_space<vmem>>, vector<8x64xf32>
    tpu.vector_store %arg11[%c0_208, %c0_209], %337 {strides = array<i32>} : memref<8x64xf32, #tpu.memory_space<vmem>>, vector<8x64xf32>,
    %c0_210 = arith.constant 0 : index
    %c0_211 = arith.constant 0 : index
    %341 = vector.load %arg10[%c0_210, %c0_211] : memref<8x64xf32, #tpu.memory_space<vmem>>, vector<8x64xf32>
    tpu.vector_store %arg10[%c0_210, %c0_211], %339 {strides = array<i32>} : memref<8x64xf32, #tpu.memory_space<vmem>>, vector<8x64xf32>,
    %c0_212 = arith.constant 0 : index
    %c0_213 = arith.constant 0 : index
    %342 = vector.load %arg12[%c0_212, %c0_213] : memref<8x64xf32, #tpu.memory_space<vmem>>, vector<8x64xf32>
    %343 = arith.addf %342, %339 : vector<8x64xf32>
    %c0_214 = arith.constant 0 : index
    %c0_215 = arith.constant 0 : index
    %344 = vector.load %arg12[%c0_214, %c0_215] : memref<8x64xf32, #tpu.memory_space<vmem>>, vector<8x64xf32>
    tpu.vector_store %arg12[%c0_214, %c0_215], %343 {strides = array<i32>} : memref<8x64xf32, #tpu.memory_space<vmem>>, vector<8x64xf32>,
    %c12_i32 = arith.constant 12 : i32
    %c8_i32_216 = arith.constant 8 : i32
    %345 = arith.muli %c12_i32, %c8_i32_216 : i32
    %346 = arith.index_cast %345 : i32 to index
    %c0_217 = arith.constant 0 : index
    %347 = vector.load %arg9[%346, %c0_217] : memref<112x256xf32, #tpu.memory_space<vmem>>, vector<8x256xf32>
    %c0_218 = arith.constant 0 : index
    %c0_219 = arith.constant 0 : index
    %348 = vector.load %arg10[%c0_218, %c0_219] : memref<8x64xf32, #tpu.memory_space<vmem>>, vector<8x64xf32>
    %cst_220 = arith.constant dense<0.000000e+00> : vector<8x256xf32>
    %349 = tpu.matmul %348, %20, %cst_220 {dimension_numbers = #tpu.dot_dimension_numbers<[1], [0], [0], [1], [0, 0, 1, 1], [], []>} : vector<8x64xf32>, vector<64x256xf32>, vector<8x256xf32> -> vector<8x256xf32>
    %350 = arith.addf %347, %349 : vector<8x256xf32>
    %351 = arith.negf %350 : vector<8x256xf32>
    %352 = math.exp %351 : vector<8x256xf32>
    %cst_221 = arith.constant 1.000000e+00 : f32
    %353 = vector.broadcast %cst_221 : f32 to vector<8x256xf32>
    %354 = arith.addf %353, %352 : vector<8x256xf32>
    %355 = arith.divf %353, %354 : vector<8x256xf32>
    %356 = vector.extract_strided_slice %355 {offsets = [0, 0], sizes = [8, 64], strides = [1, 1]} : vector<8x256xf32> to vector<8x64xf32>
    %357 = vector.extract_strided_slice %355 {offsets = [0, 64], sizes = [8, 64], strides = [1, 1]} : vector<8x256xf32> to vector<8x64xf32>
    %358 = vector.extract_strided_slice %350 {offsets = [0, 128], sizes = [8, 64], strides = [1, 1]} : vector<8x256xf32> to vector<8x64xf32>
    %359 = math.tanh %358 : vector<8x64xf32>
    %360 = vector.extract_strided_slice %355 {offsets = [0, 192], sizes = [8, 64], strides = [1, 1]} : vector<8x256xf32> to vector<8x64xf32>
    %c0_222 = arith.constant 0 : index
    %c0_223 = arith.constant 0 : index
    %361 = vector.load %arg11[%c0_222, %c0_223] : memref<8x64xf32, #tpu.memory_space<vmem>>, vector<8x64xf32>
    %362 = arith.mulf %357, %361 : vector<8x64xf32>
    %363 = arith.mulf %356, %359 : vector<8x64xf32>
    %364 = arith.addf %362, %363 : vector<8x64xf32>
    %365 = math.tanh %364 : vector<8x64xf32>
    %366 = arith.mulf %360, %365 : vector<8x64xf32>
    %c0_224 = arith.constant 0 : index
    %c0_225 = arith.constant 0 : index
    %367 = vector.load %arg11[%c0_224, %c0_225] : memref<8x64xf32, #tpu.memory_space<vmem>>, vector<8x64xf32>
    tpu.vector_store %arg11[%c0_224, %c0_225], %364 {strides = array<i32>} : memref<8x64xf32, #tpu.memory_space<vmem>>, vector<8x64xf32>,
    %c0_226 = arith.constant 0 : index
    %c0_227 = arith.constant 0 : index
    %368 = vector.load %arg10[%c0_226, %c0_227] : memref<8x64xf32, #tpu.memory_space<vmem>>, vector<8x64xf32>
    tpu.vector_store %arg10[%c0_226, %c0_227], %366 {strides = array<i32>} : memref<8x64xf32, #tpu.memory_space<vmem>>, vector<8x64xf32>,
    %c0_228 = arith.constant 0 : index
    %c0_229 = arith.constant 0 : index
    %369 = vector.load %arg12[%c0_228, %c0_229] : memref<8x64xf32, #tpu.memory_space<vmem>>, vector<8x64xf32>
    %370 = arith.addf %369, %366 : vector<8x64xf32>
    %c0_230 = arith.constant 0 : index
    %c0_231 = arith.constant 0 : index
    %371 = vector.load %arg12[%c0_230, %c0_231] : memref<8x64xf32, #tpu.memory_space<vmem>>, vector<8x64xf32>
    tpu.vector_store %arg12[%c0_230, %c0_231], %370 {strides = array<i32>} : memref<8x64xf32, #tpu.memory_space<vmem>>, vector<8x64xf32>,
    %c13_i32 = arith.constant 13 : i32
    %c8_i32_232 = arith.constant 8 : i32
    %372 = arith.muli %c13_i32, %c8_i32_232 : i32
    %373 = arith.index_cast %372 : i32 to index
    %c0_233 = arith.constant 0 : index
    %374 = vector.load %arg9[%373, %c0_233] : memref<112x256xf32, #tpu.memory_space<vmem>>, vector<8x256xf32>
    %c0_234 = arith.constant 0 : index
    %c0_235 = arith.constant 0 : index
    %375 = vector.load %arg10[%c0_234, %c0_235] : memref<8x64xf32, #tpu.memory_space<vmem>>, vector<8x64xf32>
    %cst_236 = arith.constant dense<0.000000e+00> : vector<8x256xf32>
    %376 = tpu.matmul %375, %20, %cst_236 {dimension_numbers = #tpu.dot_dimension_numbers<[1], [0], [0], [1], [0, 0, 1, 1], [], []>} : vector<8x64xf32>, vector<64x256xf32>, vector<8x256xf32> -> vector<8x256xf32>
    %377 = arith.addf %374, %376 : vector<8x256xf32>
    %378 = arith.negf %377 : vector<8x256xf32>
    %379 = math.exp %378 : vector<8x256xf32>
    %cst_237 = arith.constant 1.000000e+00 : f32
    %380 = vector.broadcast %cst_237 : f32 to vector<8x256xf32>
    %381 = arith.addf %380, %379 : vector<8x256xf32>
    %382 = arith.divf %380, %381 : vector<8x256xf32>
    %383 = vector.extract_strided_slice %382 {offsets = [0, 0], sizes = [8, 64], strides = [1, 1]} : vector<8x256xf32> to vector<8x64xf32>
    %384 = vector.extract_strided_slice %382 {offsets = [0, 64], sizes = [8, 64], strides = [1, 1]} : vector<8x256xf32> to vector<8x64xf32>
    %385 = vector.extract_strided_slice %377 {offsets = [0, 128], sizes = [8, 64], strides = [1, 1]} : vector<8x256xf32> to vector<8x64xf32>
    %386 = math.tanh %385 : vector<8x64xf32>
    %387 = vector.extract_strided_slice %382 {offsets = [0, 192], sizes = [8, 64], strides = [1, 1]} : vector<8x256xf32> to vector<8x64xf32>
    %c0_238 = arith.constant 0 : index
    %c0_239 = arith.constant 0 : index
    %388 = vector.load %arg11[%c0_238, %c0_239] : memref<8x64xf32, #tpu.memory_space<vmem>>, vector<8x64xf32>
    %389 = arith.mulf %384, %388 : vector<8x64xf32>
    %390 = arith.mulf %383, %386 : vector<8x64xf32>
    %391 = arith.addf %389, %390 : vector<8x64xf32>
    %392 = math.tanh %391 : vector<8x64xf32>
    %393 = arith.mulf %387, %392 : vector<8x64xf32>
    %c0_240 = arith.constant 0 : index
    %c0_241 = arith.constant 0 : index
    %394 = vector.load %arg11[%c0_240, %c0_241] : memref<8x64xf32, #tpu.memory_space<vmem>>, vector<8x64xf32>
    tpu.vector_store %arg11[%c0_240, %c0_241], %391 {strides = array<i32>} : memref<8x64xf32, #tpu.memory_space<vmem>>, vector<8x64xf32>,
    %c0_242 = arith.constant 0 : index
    %c0_243 = arith.constant 0 : index
    %395 = vector.load %arg10[%c0_242, %c0_243] : memref<8x64xf32, #tpu.memory_space<vmem>>, vector<8x64xf32>
    tpu.vector_store %arg10[%c0_242, %c0_243], %393 {strides = array<i32>} : memref<8x64xf32, #tpu.memory_space<vmem>>, vector<8x64xf32>,
    %c0_244 = arith.constant 0 : index
    %c0_245 = arith.constant 0 : index
    %396 = vector.load %arg12[%c0_244, %c0_245] : memref<8x64xf32, #tpu.memory_space<vmem>>, vector<8x64xf32>
    %397 = arith.addf %396, %393 : vector<8x64xf32>
    %c0_246 = arith.constant 0 : index
    %c0_247 = arith.constant 0 : index
    %398 = vector.load %arg12[%c0_246, %c0_247] : memref<8x64xf32, #tpu.memory_space<vmem>>, vector<8x64xf32>
    tpu.vector_store %arg12[%c0_246, %c0_247], %397 {strides = array<i32>} : memref<8x64xf32, #tpu.memory_space<vmem>>, vector<8x64xf32>,
    %c14_i32 = arith.constant 14 : i32
    %c0_248 = arith.constant 0 : index
    %c0_249 = arith.constant 0 : index
    %399 = vector.load %arg12[%c0_248, %c0_249] : memref<8x64xf32, #tpu.memory_space<vmem>>, vector<8x64xf32>
    %cst_250 = arith.constant 0.0714285746 : f32
    %400 = vector.broadcast %cst_250 : f32 to vector<8x64xf32>
    %401 = arith.mulf %399, %400 : vector<8x64xf32>
    %c0_251 = arith.constant 0 : index
    %c0_252 = arith.constant 0 : index
    %402 = vector.load %arg6[%c0_251, %c0_252] : memref<64x6xf32, #tpu.memory_space<vmem>>, vector<64x6xf32>
    %cst_253 = arith.constant dense<0.000000e+00> : vector<8x6xf32>
    %403 = tpu.matmul %401, %402, %cst_253 {dimension_numbers = #tpu.dot_dimension_numbers<[1], [0], [0], [1], [0, 0, 1, 1], [], []>} : vector<8x64xf32>, vector<64x6xf32>, vector<8x6xf32> -> vector<8x6xf32>
    %c0_254 = arith.constant 0 : index
    %c0_255 = arith.constant 0 : index
    %404 = vector.load %arg7[%c0_254, %c0_255] : memref<1x6xf32, #tpu.memory_space<vmem>>, vector<1x6xf32>
    %405 = vector.broadcast %404 : vector<1x6xf32> to vector<8x6xf32>
    %406 = arith.addf %403, %405 : vector<8x6xf32>
    %c0_256 = arith.constant 0 : index
    %c0_257 = arith.constant 0 : index
    %407 = vector.load %arg8[%c0_256, %c0_257] : memref<8x6xf32, #tpu.memory_space<vmem>>, vector<8x6xf32>
    tpu.vector_store %arg8[%c0_256, %c0_257], %406 {strides = array<i32>} : memref<8x6xf32, #tpu.memory_space<vmem>>, vector<8x6xf32>,
    return
  }
}

</mosaic_0001>

<llo_original>
// kernel: _calstm_var_avg_forward.1
$region0: #{_calstm_var_avg_forward.1}
  #allocation0 [shape = 'u32[]', space=smem, size = 0x4, offset = 0x4, fixed_abs, tag = 'smem constant byte address 0x4 - core index']
  #allocation1 [shape = 'u32[72,128]{1,0:T(1,128)}', space=vmem, size = 0x9000, scoped, tag = 'internal scratch']
  #allocation2 [shape = 'f32[112,256]{1,0:T(8,128)}', space=vmem, size = 0x1c000, scoped, tag = 'scratch operand']
  #allocation3 [shape = 'f32[8,64]{1,0:T(8,128)}', space=vmem, size = 0x1000, scoped, tag = 'scratch operand']
  #allocation4 [shape = 'f32[8,64]{1,0:T(8,128)}', space=vmem, size = 0x1000, scoped, tag = 'scratch operand']
  #allocation5 [shape = 'f32[8,64]{1,0:T(8,128)}', space=vmem, size = 0x1000, scoped, tag = 'scratch operand']
  %s0 = inlined_call_operand.vmem [shape: f32[112,12], index: 0, kind: input, shape index: {}]
  %s1 = inlined_call_operand.vmem [shape: f32[12,64], index: 1, kind: input, shape index: {}]
  %s2 = inlined_call_operand.vmem [shape: f32[1,64], index: 2, kind: input, shape index: {}]
  %s3 = inlined_call_operand.vmem [shape: f32[64,256], index: 3, kind: input, shape index: {}]
  %s4 = inlined_call_operand.vmem [shape: f32[1,256], index: 4, kind: input, shape index: {}]
  %s5 = inlined_call_operand.vmem [shape: f32[64,256], index: 5, kind: input, shape index: {}]
  %s6 = inlined_call_operand.vmem [shape: f32[64,6], index: 6, kind: input, shape index: {}]
  %s7 = inlined_call_operand.vmem [shape: f32[1,6], index: 7, kind: input, shape index: {}]
  %s8 = inlined_call_operand.vmem [shape: f32[8,6], index: 8, kind: output, shape index: {}]
  %s9 = sld [smem:[#allocation0]]
  $region42: #{_calstm_var_avg_forward.1} parent=0
    _
  %s11 = ssub.s32 1, %s9
  %s12 = scalar_select 0, %s11, %s9
  // Predicated region
  $region2: #{_calstm_var_avg_forward.1} parent=0 // pred_check
    _
  $region3: #{_calstm_var_avg_forward.1} parent=0 // pred_check_branch
    %14 = sbr.rel (0) target = $region5
  $region4: #{_calstm_var_avg_forward.1} parent=0 // pred_region
    _
  $region5: #{_calstm_var_avg_forward.1} parent=0 // pred_fallthru
    _
  // Predicated region
  $region6: #{_calstm_var_avg_forward.1} parent=0 // pred_check
    _
  $region7: #{_calstm_var_avg_forward.1} parent=0 // pred_check_branch
    %16 = sbr.rel (0) target = $region9
  $region8: #{_calstm_var_avg_forward.1} parent=0 // pred_region
    _
  $region9: #{_calstm_var_avg_forward.1} parent=0 // pred_fallthru
    _
  // Predicated region
  $region10: #{_calstm_var_avg_forward.1} parent=0 // pred_check
    _
  $region11: #{_calstm_var_avg_forward.1} parent=0 // pred_check_branch
    %18 = sbr.rel (0) target = $region13
  $region12: #{_calstm_var_avg_forward.1} parent=0 // pred_region
    _
  $region13: #{_calstm_var_avg_forward.1} parent=0 // pred_fallthru
    _
  // Predicated region
  $region14: #{_calstm_var_avg_forward.1} parent=0 // pred_check
    _
  $region15: #{_calstm_var_avg_forward.1} parent=0 // pred_check_branch
    %20 = sbr.rel (0) target = $region17
  $region16: #{_calstm_var_avg_forward.1} parent=0 // pred_region
    _
  $region17: #{_calstm_var_avg_forward.1} parent=0 // pred_fallthru
    _
  // Predicated region
  $region18: #{_calstm_var_avg_forward.1} parent=0 // pred_check
    _
  $region19: #{_calstm_var_avg_forward.1} parent=0 // pred_check_branch
    %22 = sbr.rel (0) target = $region21
  $region20: #{_calstm_var_avg_forward.1} parent=0 // pred_region
    _
  $region21: #{_calstm_var_avg_forward.1} parent=0 // pred_fallthru
    _
  // Predicated region
  $region22: #{_calstm_var_avg_forward.1} parent=0 // pred_check
    _
  $region23: #{_calstm_var_avg_forward.1} parent=0 // pred_check_branch
    %24 = sbr.rel (0) target = $region25
  $region24: #{_calstm_var_avg_forward.1} parent=0 // pred_region
    _
  $region25: #{_calstm_var_avg_forward.1} parent=0 // pred_fallthru
    _
  // Predicated region
  $region26: #{_calstm_var_avg_forward.1} parent=0 // pred_check
    _
  $region27: #{_calstm_var_avg_forward.1} parent=0 // pred_check_branch
    %26 = sbr.rel (0) target = $region29
  $region28: #{_calstm_var_avg_forward.1} parent=0 // pred_region
    _
  $region29: #{_calstm_var_avg_forward.1} parent=0 // pred_fallthru
    _
  // Predicated region
  $region30: #{_calstm_var_avg_forward.1} parent=0 // pred_check
    _
  $region31: #{_calstm_var_avg_forward.1} parent=0 // pred_check_branch
    %28 = sbr.rel (0) target = $region33
  $region32: #{_calstm_var_avg_forward.1} parent=0 // pred_region
    _
  $region33: #{_calstm_var_avg_forward.1} parent=0 // pred_fallthru
    _
  %v29 = vld [vmem:[%s0] sm:$0xff]
  %v30 = vld [vmem:[%s0 + $0x8] sm:$0xff]
  %v31 = vld [vmem:[%s0 + $0x10] sm:$0xff]
  %v32 = vld [vmem:[%s0 + $0x18] sm:$0xff]
  %v33 = vld [vmem:[%s0 + $0x20] sm:$0xff]
  %v34 = vld [vmem:[%s0 + $0x28] sm:$0xff]
  %v35 = vld [vmem:[%s0 + $0x30] sm:$0xff]
  %v36 = vld [vmem:[%s0 + $0x38] sm:$0xff]
  %v37 = vld [vmem:[%s0 + $0x40] sm:$0xff]
  %v38 = vld [vmem:[%s0 + $0x48] sm:$0xff]
  %v39 = vld [vmem:[%s0 + $0x50] sm:$0xff]
  %v40 = vld [vmem:[%s0 + $0x58] sm:$0xff]
  %v41 = vld [vmem:[%s0 + $0x60] sm:$0xff]
  %v42 = vld [vmem:[%s0 + $0x68] sm:$0xff]
  %v43 = vld [vmem:[%s1] sm:$0xff]
  %v44 = vld [vmem:[%s1 + $0x8] sm:$0xf]
  %v45 = vld [vmem:[%s2] sm:$0x1]
  %v47 = vperm.slane %v45, 0
  %vm49 = vcmask 97280
  %v51 = vsel %vm49, %v29, 0
  %v54 = vsel %vm49, %v30, 0
  %v57 = vsel %vm49, %v31, 0
  %v60 = vsel %vm49, %v32, 0
  %v63 = vsel %vm49, %v33, 0
  %v66 = vsel %vm49, %v34, 0
  %v69 = vsel %vm49, %v35, 0
  %v72 = vsel %vm49, %v36, 0
  %v75 = vsel %vm49, %v37, 0
  %v78 = vsel %vm49, %v38, 0
  %v81 = vsel %vm49, %v39, 0
  %v84 = vsel %vm49, %v40, 0
  %v87 = vsel %vm49, %v41, 0
  %v90 = vsel %vm49, %v42, 0
  %vm92 = vcmask 1043456
  %v94 = vsel %vm92, %v44, 0
  %96 = vmatpush.msra.mxu0 0.0
  %97 = vmatpush.msra.mxu0 0.0
  %98 = vmatpush.msra.mxu0 0.0
  %99 = vmatpush.msra.mxu0 0.0
  %100 = vmatpush.msra.mxu0 0.0
  %101 = vmatpush.msra.mxu0 0.0
  %102 = vmatpush.msra.mxu0 0.0
  %103 = vmatpush.msra.mxu0 0.0
  %104 = vmatpush.msra.mxu0 0.0
  %105 = vmatpush.msra.mxu0 0.0
  %106 = vmatpush.msra.mxu0 0.0
  %107 = vmatpush.msra.mxu0 0.0
  %108 = vmatpush.msra.mxu0 0.0
  %109 = vmatpush.msra.mxu0 0.0
  %110 = vmatpush.msra.mxu0 %v94
  %111 = vmatpush.msra.mxu0 %v43
  %112 = vmatmul.f32.gmra.mxu0 %v51
  %v113 = vpop.f32.mrf.mxu0
  %v114 = vadd.f32 %v47, %v113
  %115 = vmatmul.f32.gmra.mxu0 %v54
  %v116 = vpop.f32.mrf.mxu0
  %v117 = vadd.f32 %v47, %v116
  %118 = vmatmul.f32.gmra.mxu0 %v57
  %v119 = vpop.f32.mrf.mxu0
  %v120 = vadd.f32 %v47, %v119
  %121 = vmatmul.f32.gmra.mxu0 %v60
  %v122 = vpop.f32.mrf.mxu0
  %v123 = vadd.f32 %v47, %v122
  %124 = vmatmul.f32.gmra.mxu0 %v63
  %v125 = vpop.f32.mrf.mxu0
  %v126 = vadd.f32 %v47, %v125
  %127 = vmatmul.f32.gmra.mxu0 %v66
  %v128 = vpop.f32.mrf.mxu0
  %v129 = vadd.f32 %v47, %v128
  %130 = vmatmul.f32.gmra.mxu0 %v69
  %v131 = vpop.f32.mrf.mxu0
  %v132 = vadd.f32 %v47, %v131
  %133 = vmatmul.f32.gmra.mxu0 %v72
  %v134 = vpop.f32.mrf.mxu0
  %v135 = vadd.f32 %v47, %v134
  %136 = vmatmul.f32.gmra.mxu0 %v75
  %v137 = vpop.f32.mrf.mxu0
  %v138 = vadd.f32 %v47, %v137
  %139 = vmatmul.f32.gmra.mxu0 %v78
  %v140 = vpop.f32.mrf.mxu0
  %v141 = vadd.f32 %v47, %v140
  %142 = vmatmul.f32.gmra.mxu0 %v81
  %v143 = vpop.f32.mrf.mxu0
  %v144 = vadd.f32 %v47, %v143
  %145 = vmatmul.f32.gmra.mxu0 %v84
  %v146 = vpop.f32.mrf.mxu0
  %v147 = vadd.f32 %v47, %v146
  %148 = vmatmul.f32.gmra.mxu0 %v87
  %v149 = vpop.f32.mrf.mxu0
  %v150 = vadd.f32 %v47, %v149
  %151 = vmatmul.f32.gmra.mxu0 %v90
  %v152 = vpop.f32.mrf.mxu0
  %v153 = vadd.f32 %v47, %v152
  %154 = vdwg.mxu0
  %v155 = vmax.f32 %v114, 0.0
  %v156 = vmax.f32 %v117, 0.0
  %v157 = vmax.f32 %v120, 0.0
  %v158 = vmax.f32 %v123, 0.0
  %v159 = vmax.f32 %v126, 0.0
  %v160 = vmax.f32 %v129, 0.0
  %v161 = vmax.f32 %v132, 0.0
  %v162 = vmax.f32 %v135, 0.0
  %v163 = vmax.f32 %v138, 0.0
  %v164 = vmax.f32 %v141, 0.0
  %v165 = vmax.f32 %v144, 0.0
  %v166 = vmax.f32 %v147, 0.0
  %v167 = vmax.f32 %v150, 0.0
  %v168 = vmax.f32 %v153, 0.0
  %v169 = vld [vmem:[%s3] sm:$0xff]
  %v170 = vld [vmem:[%s3 + $0x8] sm:$0xff]
  %v171 = vld [vmem:[%s3 + $0x10] sm:$0xff]
  %v172 = vld [vmem:[%s3 + $0x18] sm:$0xff]
  %v173 = vld [vmem:[%s3 + $0x20] sm:$0xff]
  %v174 = vld [vmem:[%s3 + $0x28] sm:$0xff]
  %v175 = vld [vmem:[%s3 + $0x30] sm:$0xff]
  %v176 = vld [vmem:[%s3 + $0x38] sm:$0xff]
  %v177 = vld [vmem:[%s3 + $0x40] sm:$0xff]
  %v178 = vld [vmem:[%s3 + $0x48] sm:$0xff]
  %v179 = vld [vmem:[%s3 + $0x50] sm:$0xff]
  %v180 = vld [vmem:[%s3 + $0x58] sm:$0xff]
  %v181 = vld [vmem:[%s3 + $0x60] sm:$0xff]
  %v182 = vld [vmem:[%s3 + $0x68] sm:$0xff]
  %v183 = vld [vmem:[%s3 + $0x70] sm:$0xff]
  %v184 = vld [vmem:[%s3 + $0x78] sm:$0xff]
  %v185 = vld [vmem:[%s4] sm:$0x3]
  %v187 = vperm.slane %v185, 0
  %v188 = vperm.slane %v185, 1
  %vm191 = vcmask 523264
  %v193 = vsel %vm191, %v155, 0
  %v196 = vsel %vm191, %v156, 0
  %v199 = vsel %vm191, %v157, 0
  %v202 = vsel %vm191, %v158, 0
  %v205 = vsel %vm191, %v159, 0
  %v208 = vsel %vm191, %v160, 0
  %v211 = vsel %vm191, %v161, 0
  %v214 = vsel %vm191, %v162, 0
  %v217 = vsel %vm191, %v163, 0
  %v220 = vsel %vm191, %v164, 0
  %v223 = vsel %vm191, %v165, 0
  %v226 = vsel %vm191, %v166, 0
  %v229 = vsel %vm191, %v167, 0
  %v232 = vsel %vm191, %v168, 0
  %234 = vmatpush.msra.mxu0 0.0
  %235 = vmatpush.msra.mxu0 0.0
  %236 = vmatpush.msra.mxu0 0.0
  %237 = vmatpush.msra.mxu0 0.0
  %238 = vmatpush.msra.mxu0 0.0
  %239 = vmatpush.msra.mxu0 0.0
  %240 = vmatpush.msra.mxu0 0.0
  %241 = vmatpush.msra.mxu0 0.0
  %242 = vmatpush.msra.mxu0 %v183
  %243 = vmatpush.msra.mxu0 %v181
  %244 = vmatpush.msra.mxu0 %v179
  %245 = vmatpush.msra.mxu0 %v177
  %246 = vmatpush.msra.mxu0 %v175
  %247 = vmatpush.msra.mxu0 %v173
  %248 = vmatpush.msra.mxu0 %v171
  %249 = vmatpush.msra.mxu0 %v169
  %250 = vmatmul.f32.gmra.mxu0 %v193
  %v251 = vpop.f32.mrf.mxu0
  %v252 = vadd.f32 %v187, %v251
  %253 = vmatmul.f32.gmra.mxu0 %v196
  %v254 = vpop.f32.mrf.mxu0
  %v255 = vadd.f32 %v187, %v254
  %256 = vmatmul.f32.gmra.mxu0 %v199
  %v257 = vpop.f32.mrf.mxu0
  %v258 = vadd.f32 %v187, %v257
  %259 = vmatmul.f32.gmra.mxu0 %v202
  %v260 = vpop.f32.mrf.mxu0
  %v261 = vadd.f32 %v187, %v260
  %262 = vmatmul.f32.gmra.mxu0 %v205
  %v263 = vpop.f32.mrf.mxu0
  %v264 = vadd.f32 %v187, %v263
  %265 = vmatmul.f32.gmra.mxu0 %v208
  %v266 = vpop.f32.mrf.mxu0
  %v267 = vadd.f32 %v187, %v266
  %268 = vmatmul.f32.gmra.mxu0 %v211
  %v269 = vpop.f32.mrf.mxu0
  %v270 = vadd.f32 %v187, %v269
  %271 = vmatmul.f32.gmra.mxu0 %v214
  %v272 = vpop.f32.mrf.mxu0
  %v273 = vadd.f32 %v187, %v272
  %274 = vmatmul.f32.gmra.mxu0 %v217
  %v275 = vpop.f32.mrf.mxu0
  %v276 = vadd.f32 %v187, %v275
  %277 = vmatmul.f32.gmra.mxu0 %v220
  %v278 = vpop.f32.mrf.mxu0
  %v279 = vadd.f32 %v187, %v278
  %280 = vmatmul.f32.gmra.mxu0 %v223
  %v281 = vpop.f32.mrf.mxu0
  %v282 = vadd.f32 %v187, %v281
  %283 = vmatmul.f32.gmra.mxu0 %v226
  %v284 = vpop.f32.mrf.mxu0
  %v285 = vadd.f32 %v187, %v284
  %286 = vmatmul.f32.gmra.mxu0 %v229
  %v287 = vpop.f32.mrf.mxu0
  %v288 = vadd.f32 %v187, %v287
  %289 = vmatmul.f32.gmra.mxu0 %v232
  %v290 = vpop.f32.mrf.mxu0
  %v291 = vadd.f32 %v187, %v290
  %292 = vdwg.mxu0
  %293 = vmatpush.msra.mxu0 0.0
  %294 = vmatpush.msra.mxu0 0.0
  %295 = vmatpush.msra.mxu0 0.0
  %296 = vmatpush.msra.mxu0 0.0
  %297 = vmatpush.msra.mxu0 0.0
  %298 = vmatpush.msra.mxu0 0.0
  %299 = vmatpush.msra.mxu0 0.0
  %300 = vmatpush.msra.mxu0 0.0
  %301 = vmatpush.msra.mxu0 %v184
  %302 = vmatpush.msra.mxu0 %v182
  %303 = vmatpush.msra.mxu0 %v180
  %304 = vmatpush.msra.mxu0 %v178
  %305 = vmatpush.msra.mxu0 %v176
  %306 = vmatpush.msra.mxu0 %v174
  %307 = vmatpush.msra.mxu0 %v172
  %308 = vmatpush.msra.mxu0 %v170
  %309 = vmatmul.f32.gmra.mxu0 %v193
  %v310 = vpop.f32.mrf.mxu0
  %v311 = vadd.f32 %v188, %v310
  %312 = vmatmul.f32.gmra.mxu0 %v196
  %v313 = vpop.f32.mrf.mxu0
  %v314 = vadd.f32 %v188, %v313
  %315 = vmatmul.f32.gmra.mxu0 %v199
  %v316 = vpop.f32.mrf.mxu0
  %v317 = vadd.f32 %v188, %v316
  %318 = vmatmul.f32.gmra.mxu0 %v202
  %v319 = vpop.f32.mrf.mxu0
  %v320 = vadd.f32 %v188, %v319
  %321 = vmatmul.f32.gmra.mxu0 %v205
  %v322 = vpop.f32.mrf.mxu0
  %v323 = vadd.f32 %v188, %v322
  %324 = vmatmul.f32.gmra.mxu0 %v208
  %v325 = vpop.f32.mrf.mxu0
  %v326 = vadd.f32 %v188, %v325
  %327 = vmatmul.f32.gmra.mxu0 %v211
  %v328 = vpop.f32.mrf.mxu0
  %v329 = vadd.f32 %v188, %v328
  %330 = vmatmul.f32.gmra.mxu0 %v214
  %v331 = vpop.f32.mrf.mxu0
  %v332 = vadd.f32 %v188, %v331
  %333 = vmatmul.f32.gmra.mxu0 %v217
  %v334 = vpop.f32.mrf.mxu0
  %v335 = vadd.f32 %v188, %v334
  %336 = vmatmul.f32.gmra.mxu0 %v220
  %v337 = vpop.f32.mrf.mxu0
  %v338 = vadd.f32 %v188, %v337
  %339 = vmatmul.f32.gmra.mxu0 %v223
  %v340 = vpop.f32.mrf.mxu0
  %v341 = vadd.f32 %v188, %v340
  %342 = vmatmul.f32.gmra.mxu0 %v226
  %v343 = vpop.f32.mrf.mxu0
  %v344 = vadd.f32 %v188, %v343
  %345 = vmatmul.f32.gmra.mxu0 %v229
  %v346 = vpop.f32.mrf.mxu0
  %v347 = vadd.f32 %v188, %v346
  %348 = vmatmul.f32.gmra.mxu0 %v232
  %v349 = vpop.f32.mrf.mxu0
  %v350 = vadd.f32 %v188, %v349
  %351 = vdwg.mxu0
  %352 = vst [vmem:[#allocation2] sm:$0xff] %v252
  %353 = vst [vmem:[#allocation2 + $0x8] sm:$0xff] %v311
  %354 = vst [vmem:[#allocation2 + $0x10] sm:$0xff] %v255
  %355 = vst [vmem:[#allocation2 + $0x18] sm:$0xff] %v314
  %356 = vst [vmem:[#allocation2 + $0x20] sm:$0xff] %v258
  %357 = vst [vmem:[#allocation2 + $0x28] sm:$0xff] %v317
  %358 = vst [vmem:[#allocation2 + $0x30] sm:$0xff] %v261
  %359 = vst [vmem:[#allocation2 + $0x38] sm:$0xff] %v320
  %360 = vst [vmem:[#allocation2 + $0x40] sm:$0xff] %v264
  %361 = vst [vmem:[#allocation2 + $0x48] sm:$0xff] %v323
  %362 = vst [vmem:[#allocation2 + $0x50] sm:$0xff] %v267
  %363 = vst [vmem:[#allocation2 + $0x58] sm:$0xff] %v326
  %364 = vst [vmem:[#allocation2 + $0x60] sm:$0xff] %v270
  %365 = vst [vmem:[#allocation2 + $0x68] sm:$0xff] %v329
  %366 = vst [vmem:[#allocation2 + $0x70] sm:$0xff] %v273
  %367 = vst [vmem:[#allocation2 + $0x78] sm:$0xff] %v332
  %368 = vst [vmem:[#allocation2 + $0x80] sm:$0xff] %v276
  %369 = vst [vmem:[#allocation2 + $0x88] sm:$0xff] %v335
  %370 = vst [vmem:[#allocation2 + $0x90] sm:$0xff] %v279
  %371 = vst [vmem:[#allocation2 + $0x98] sm:$0xff] %v338
  %372 = vst [vmem:[#allocation2 + $0xa0] sm:$0xff] %v282
  %373 = vst [vmem:[#allocation2 + $0xa8] sm:$0xff] %v341
  %374 = vst [vmem:[#allocation2 + $0xb0] sm:$0xff] %v285
  %375 = vst [vmem:[#allocation2 + $0xb8] sm:$0xff] %v344
  %376 = vst [vmem:[#allocation2 + $0xc0] sm:$0xff] %v288
  %377 = vst [vmem:[#allocation2 + $0xc8] sm:$0xff] %v347
  %378 = vst [vmem:[#allocation2 + $0xd0] sm:$0xff] %v291
  %379 = vst [vmem:[#allocation2 + $0xd8] sm:$0xff] %v350
  %380 = vst.msk [vmem:[#allocation3] sm:$0xff] %vm191, 0.0
  %381 = vst.msk [vmem:[#allocation4] sm:$0xff] %vm191, 0.0
  %382 = vst.msk [vmem:[#allocation5] sm:$0xff] %vm191, 0.0
  %v383 = vld [vmem:[%s5] sm:$0xff]
  %v384 = vld [vmem:[%s5 + $0x8] sm:$0xff]
  %v385 = vld [vmem:[%s5 + $0x10] sm:$0xff]
  %v386 = vld [vmem:[%s5 + $0x18] sm:$0xff]
  %v387 = vld [vmem:[%s5 + $0x20] sm:$0xff]
  %v388 = vld [vmem:[%s5 + $0x28] sm:$0xff]
  %v389 = vld [vmem:[%s5 + $0x30] sm:$0xff]
  %v390 = vld [vmem:[%s5 + $0x38] sm:$0xff]
  %v391 = vld [vmem:[%s5 + $0x40] sm:$0xff]
  %v392 = vld [vmem:[%s5 + $0x48] sm:$0xff]
  %v393 = vld [vmem:[%s5 + $0x50] sm:$0xff]
  %v394 = vld [vmem:[%s5 + $0x58] sm:$0xff]
  %v395 = vld [vmem:[%s5 + $0x60] sm:$0xff]
  %v396 = vld [vmem:[%s5 + $0x68] sm:$0xff]
  %v397 = vld [vmem:[%s5 + $0x70] sm:$0xff]
  %v398 = vld [vmem:[%s5 + $0x78] sm:$0xff]
  %v399 = vld [vmem:[#allocation2] sm:$0xff]
  %v400 = vld [vmem:[#allocation2 + $0x8] sm:$0xff]
  %v401 = vld [vmem:[#allocation3] sm:$0xff]
  %v403 = vsel %vm191, %v401, 0
  %405 = vmatpush.msra.mxu0 0.0
  %406 = vmatpush.msra.mxu0 0.0
  %407 = vmatpush.msra.mxu0 0.0
  %408 = vmatpush.msra.mxu0 0.0
  %409 = vmatpush.msra.mxu0 0.0
  %410 = vmatpush.msra.mxu0 0.0
  %411 = vmatpush.msra.mxu0 0.0
  %412 = vmatpush.msra.mxu0 0.0
  %413 = vmatpush.msra.mxu0 %v397
  %414 = vmatpush.msra.mxu0 %v395
  %415 = vmatpush.msra.mxu0 %v393
  %416 = vmatpush.msra.mxu0 %v391
  %417 = vmatpush.msra.mxu0 %v389
  %418 = vmatpush.msra.mxu0 %v387
  %419 = vmatpush.msra.mxu0 %v385
  %420 = vmatpush.msra.mxu0 %v383
  %421 = vmatmul.f32.gmra.mxu0 %v403
  %v422 = vpop.f32.mrf.mxu0
  %v423 = vadd.f32 0.0, %v422
  %424 = vdwg.mxu0
  %425 = vmatpush.msra.mxu0 0.0
  %426 = vmatpush.msra.mxu0 0.0
  %427 = vmatpush.msra.mxu0 0.0
  %428 = vmatpush.msra.mxu0 0.0
  %429 = vmatpush.msra.mxu0 0.0
  %430 = vmatpush.msra.mxu0 0.0
  %431 = vmatpush.msra.mxu0 0.0
  %432 = vmatpush.msra.mxu0 0.0
  %433 = vmatpush.msra.mxu0 %v398
  %434 = vmatpush.msra.mxu0 %v396
  %435 = vmatpush.msra.mxu0 %v394
  %436 = vmatpush.msra.mxu0 %v392
  %437 = vmatpush.msra.mxu0 %v390
  %438 = vmatpush.msra.mxu0 %v388
  %439 = vmatpush.msra.mxu0 %v386
  %440 = vmatpush.msra.mxu0 %v384
  %441 = vmatmul.f32.gmra.mxu0 %v403
  %v442 = vpop.f32.mrf.mxu0
  %v443 = vadd.f32 0.0, %v442
  %444 = vdwg.mxu0
  %v445 = vadd.f32 %v399, %v423
  %v446 = vadd.f32 %v400, %v443
  %v447 = vxor.u32 %v445, 2147483648
  %v448 = vxor.u32 %v446, 2147483648
  %v449 = vmul.f32 %v447, 1.442695
  %v450 = vpow.pop %v449
  %v451 = vmul.f32 %v448, 1.442695
  %v452 = vpow.pop %v451
  %v453 = vadd.f32 %v450, 1.0
  %v454 = vadd.f32 %v452, 1.0
  %v455 = vrcp.pop %v453
  %v456 = vmul.f32 %v453, %v455
  %v457 = vsub.f32 1.0, %v456
  %v458 = vmul.f32 %v455, %v457
  %v459 = vadd.f32 %v455, %v458
  %vm460 = vweird.f32 %v453
  %vm461 = vweird.f32 %v455
  %vm462 = vmor %vm460, %vm461
  %v463 = vsel %vm462, %v455, %v459
  %v464 = vand.u32 2147483647, %v453
  %vm465 = vcmp.eq.f32.partialorder %v464, 8.507059e+37
  %v466 = vand.u32 %v453, 2147483648
  %v467 = vor.u32 1.1754944e-38, %v466
  %v468 = vsel %vm465, %v467, %v463
  %v469 = vmul.f32 1.0, %v468
  %v470 = vrcp.pop %v454
  %v471 = vmul.f32 %v454, %v470
  %v472 = vsub.f32 1.0, %v471
  %v473 = vmul.f32 %v470, %v472
  %v474 = vadd.f32 %v470, %v473
  %vm475 = vweird.f32 %v454
  %vm476 = vweird.f32 %v470
  %vm477 = vmor %vm475, %vm476
  %v478 = vsel %vm477, %v470, %v474
  %v479 = vand.u32 2147483647, %v454
  %vm480 = vcmp.eq.f32.partialorder %v479, 8.507059e+37
  %v481 = vand.u32 %v454, 2147483648
  %v482 = vor.u32 1.1754944e-38, %v481
  %v483 = vsel %vm480, %v482, %v478
  %v484 = vmul.f32 1.0, %v483
  %v485 = vtanh.pop %v446
  %v486 = vld [vmem:[#allocation4] sm:$0xff]
  %488 = vrot.lane.b32.xlu0 %v486, 64
  %v489 = vpop.permute.xlu0 %488
  %v491 = vmul.f32 %v469, %v489
  %v492 = vmul.f32 %v469, %v485
  %494 = vrot.lane.b32.xlu0 %v492, 64
  %v495 = vpop.permute.xlu0 %494
  %v497 = vadd.f32 %v491, %v495
  %v498 = vtanh.pop %v497
  %v499 = vmul.f32 %v484, %v498
  %501 = vrot.lane.b32.xlu0 %v497, 64
  %v502 = vpop.permute.xlu0 %501
  %504 = vst.msk [vmem:[#allocation4] sm:$0xff] %vm191, %v502
  %506 = vrot.lane.b32.xlu0 %v499, 64
  %v507 = vpop.permute.xlu0 %506
  %509 = vst.msk [vmem:[#allocation3] sm:$0xff] %vm191, %v507
  %v510 = vld [vmem:[#allocation5] sm:$0xff]
  %v511 = vadd.f32 %v510, %v507
  %512 = vst.msk [vmem:[#allocation5] sm:$0xff] %vm191, %v511
  %v513 = vld [vmem:[#allocation2 + $0x10] sm:$0xff]
  %v514 = vld [vmem:[#allocation2 + $0x18] sm:$0xff]
  %v515 = vld [vmem:[#allocation3] sm:$0xff]
  %v517 = vsel %vm191, %v515, 0
  %519 = vmatpush.msra.mxu0 0.0
  %520 = vmatpush.msra.mxu0 0.0
  %521 = vmatpush.msra.mxu0 0.0
  %522 = vmatpush.msra.mxu0 0.0
  %523 = vmatpush.msra.mxu0 0.0
  %524 = vmatpush.msra.mxu0 0.0
  %525 = vmatpush.msra.mxu0 0.0
  %526 = vmatpush.msra.mxu0 0.0
  %527 = vmatpush.msra.mxu0 %v397
  %528 = vmatpush.msra.mxu0 %v395
  %529 = vmatpush.msra.mxu0 %v393
  %530 = vmatpush.msra.mxu0 %v391
  %531 = vmatpush.msra.mxu0 %v389
  %532 = vmatpush.msra.mxu0 %v387
  %533 = vmatpush.msra.mxu0 %v385
  %534 = vmatpush.msra.mxu0 %v383
  %535 = vmatmul.f32.gmra.mxu0 %v517
  %v536 = vpop.f32.mrf.mxu0
  %v537 = vadd.f32 0.0, %v536
  %538 = vdwg.mxu0
  %539 = vmatpush.msra.mxu0 0.0
  %540 = vmatpush.msra.mxu0 0.0
  %541 = vmatpush.msra.mxu0 0.0
  %542 = vmatpush.msra.mxu0 0.0
  %543 = vmatpush.msra.mxu0 0.0
  %544 = vmatpush.msra.mxu0 0.0
  %545 = vmatpush.msra.mxu0 0.0
  %546 = vmatpush.msra.mxu0 0.0
  %547 = vmatpush.msra.mxu0 %v398
  %548 = vmatpush.msra.mxu0 %v396
  %549 = vmatpush.msra.mxu0 %v394
  %550 = vmatpush.msra.mxu0 %v392
  %551 = vmatpush.msra.mxu0 %v390
  %552 = vmatpush.msra.mxu0 %v388
  %553 = vmatpush.msra.mxu0 %v386
  %554 = vmatpush.msra.mxu0 %v384
  %555 = vmatmul.f32.gmra.mxu0 %v517
  %v556 = vpop.f32.mrf.mxu0
  %v557 = vadd.f32 0.0, %v556
  %558 = vdwg.mxu0
  %v559 = vadd.f32 %v513, %v537
  %v560 = vadd.f32 %v514, %v557
  %v561 = vxor.u32 %v559, 2147483648
  %v562 = vxor.u32 %v560, 2147483648
  %v563 = vmul.f32 %v561, 1.442695
  %v564 = vpow.pop %v563
  %v565 = vmul.f32 %v562, 1.442695
  %v566 = vpow.pop %v565
  %v567 = vadd.f32 %v564, 1.0
  %v568 = vadd.f32 %v566, 1.0
  %v569 = vrcp.pop %v567
  %v570 = vmul.f32 %v567, %v569
  %v571 = vsub.f32 1.0, %v570
  %v572 = vmul.f32 %v569, %v571
  %v573 = vadd.f32 %v569, %v572
  %vm574 = vweird.f32 %v567
  %vm575 = vweird.f32 %v569
  %vm576 = vmor %vm574, %vm575
  %v577 = vsel %vm576, %v569, %v573
  %v578 = vand.u32 2147483647, %v567
  %vm579 = vcmp.eq.f32.partialorder %v578, 8.507059e+37
  %v580 = vand.u32 %v567, 2147483648
  %v581 = vor.u32 1.1754944e-38, %v580
  %v582 = vsel %vm579, %v581, %v577
  %v583 = vmul.f32 1.0, %v582
  %v584 = vrcp.pop %v568
  %v585 = vmul.f32 %v568, %v584
  %v586 = vsub.f32 1.0, %v585
  %v587 = vmul.f32 %v584, %v586
  %v588 = vadd.f32 %v584, %v587
  %vm589 = vweird.f32 %v568
  %vm590 = vweird.f32 %v584
  %vm591 = vmor %vm589, %vm590
  %v592 = vsel %vm591, %v584, %v588
  %v593 = vand.u32 2147483647, %v568
  %vm594 = vcmp.eq.f32.partialorder %v593, 8.507059e+37
  %v595 = vand.u32 %v568, 2147483648
  %v596 = vor.u32 1.1754944e-38, %v595
  %v597 = vsel %vm594, %v596, %v592
  %v598 = vmul.f32 1.0, %v597
  %v599 = vtanh.pop %v560
  %v600 = vld [vmem:[#allocation4] sm:$0xff]
  %602 = vrot.lane.b32.xlu0 %v600, 64
  %v603 = vpop.permute.xlu0 %602
  %v605 = vmul.f32 %v583, %v603
  %v606 = vmul.f32 %v583, %v599
  %608 = vrot.lane.b32.xlu0 %v606, 64
  %v609 = vpop.permute.xlu0 %608
  %v611 = vadd.f32 %v605, %v609
  %v612 = vtanh.pop %v611
  %v613 = vmul.f32 %v598, %v612
  %615 = vrot.lane.b32.xlu0 %v611, 64
  %v616 = vpop.permute.xlu0 %615
  %618 = vst.msk [vmem:[#allocation4] sm:$0xff] %vm191, %v616
  %620 = vrot.lane.b32.xlu0 %v613, 64
  %v621 = vpop.permute.xlu0 %620
  %623 = vst.msk [vmem:[#allocation3] sm:$0xff] %vm191, %v621
  %v624 = vld [vmem:[#allocation5] sm:$0xff]
  %v625 = vadd.f32 %v624, %v621
  %626 = vst.msk [vmem:[#allocation5] sm:$0xff] %vm191, %v625
  %v627 = vld [vmem:[#allocation2 + $0x20] sm:$0xff]
  %v628 = vld [vmem:[#allocation2 + $0x28] sm:$0xff]
  %v629 = vld [vmem:[#allocation3] sm:$0xff]
  %v631 = vsel %vm191, %v629, 0
  %633 = vmatpush.msra.mxu0 0.0
  %634 = vmatpush.msra.mxu0 0.0
  %635 = vmatpush.msra.mxu0 0.0
  %636 = vmatpush.msra.mxu0 0.0
  %637 = vmatpush.msra.mxu0 0.0
  %638 = vmatpush.msra.mxu0 0.0
  %639 = vmatpush.msra.mxu0 0.0
  %640 = vmatpush.msra.mxu0 0.0
  %641 = vmatpush.msra.mxu0 %v397
  %642 = vmatpush.msra.mxu0 %v395
  %643 = vmatpush.msra.mxu0 %v393
  %644 = vmatpush.msra.mxu0 %v391
  %645 = vmatpush.msra.mxu0 %v389
  %646 = vmatpush.msra.mxu0 %v387
  %647 = vmatpush.msra.mxu0 %v385
  %648 = vmatpush.msra.mxu0 %v383
  %649 = vmatmul.f32.gmra.mxu0 %v631
  %v650 = vpop.f32.mrf.mxu0
  %v651 = vadd.f32 0.0, %v650
  %652 = vdwg.mxu0
  %653 = vmatpush.msra.mxu0 0.0
  %654 = vmatpush.msra.mxu0 0.0
  %655 = vmatpush.msra.mxu0 0.0
  %656 = vmatpush.msra.mxu0 0.0
  %657 = vmatpush.msra.mxu0 0.0
  %658 = vmatpush.msra.mxu0 0.0
  %659 = vmatpush.msra.mxu0 0.0
  %660 = vmatpush.msra.mxu0 0.0
  %661 = vmatpush.msra.mxu0 %v398
  %662 = vmatpush.msra.mxu0 %v396
  %663 = vmatpush.msra.mxu0 %v394
  %664 = vmatpush.msra.mxu0 %v392
  %665 = vmatpush.msra.mxu0 %v390
  %666 = vmatpush.msra.mxu0 %v388
  %667 = vmatpush.msra.mxu0 %v386
  %668 = vmatpush.msra.mxu0 %v384
  %669 = vmatmul.f32.gmra.mxu0 %v631
  %v670 = vpop.f32.mrf.mxu0
  %v671 = vadd.f32 0.0, %v670
  %672 = vdwg.mxu0
  %v673 = vadd.f32 %v627, %v651
  %v674 = vadd.f32 %v628, %v671
  %v675 = vxor.u32 %v673, 2147483648
  %v676 = vxor.u32 %v674, 2147483648
  %v677 = vmul.f32 %v675, 1.442695
  %v678 = vpow.pop %v677
  %v679 = vmul.f32 %v676, 1.442695
  %v680 = vpow.pop %v679
  %v681 = vadd.f32 %v678, 1.0
  %v682 = vadd.f32 %v680, 1.0
  %v683 = vrcp.pop %v681
  %v684 = vmul.f32 %v681, %v683
  %v685 = vsub.f32 1.0, %v684
  %v686 = vmul.f32 %v683, %v685
  %v687 = vadd.f32 %v683, %v686
  %vm688 = vweird.f32 %v681
  %vm689 = vweird.f32 %v683
  %vm690 = vmor %vm688, %vm689
  %v691 = vsel %vm690, %v683, %v687
  %v692 = vand.u32 2147483647, %v681
  %vm693 = vcmp.eq.f32.partialorder %v692, 8.507059e+37
  %v694 = vand.u32 %v681, 2147483648
  %v695 = vor.u32 1.1754944e-38, %v694
  %v696 = vsel %vm693, %v695, %v691
  %v697 = vmul.f32 1.0, %v696
  %v698 = vrcp.pop %v682
  %v699 = vmul.f32 %v682, %v698
  %v700 = vsub.f32 1.0, %v699
  %v701 = vmul.f32 %v698, %v700
  %v702 = vadd.f32 %v698, %v701
  %vm703 = vweird.f32 %v682
  %vm704 = vweird.f32 %v698
  %vm705 = vmor %vm703, %vm704
  %v706 = vsel %vm705, %v698, %v702
  %v707 = vand.u32 2147483647, %v682
  %vm708 = vcmp.eq.f32.partialorder %v707, 8.507059e+37
  %v709 = vand.u32 %v682, 2147483648
  %v710 = vor.u32 1.1754944e-38, %v709
  %v711 = vsel %vm708, %v710, %v706
  %v712 = vmul.f32 1.0, %v711
  %v713 = vtanh.pop %v674
  %v714 = vld [vmem:[#allocation4] sm:$0xff]
  %716 = vrot.lane.b32.xlu0 %v714, 64
  %v717 = vpop.permute.xlu0 %716
  %v719 = vmul.f32 %v697, %v717
  %v720 = vmul.f32 %v697, %v713
  %722 = vrot.lane.b32.xlu0 %v720, 64
  %v723 = vpop.permute.xlu0 %722
  %v725 = vadd.f32 %v719, %v723
  %v726 = vtanh.pop %v725
  %v727 = vmul.f32 %v712, %v726
  %729 = vrot.lane.b32.xlu0 %v725, 64
  %v730 = vpop.permute.xlu0 %729
  %732 = vst.msk [vmem:[#allocation4] sm:$0xff] %vm191, %v730
  %734 = vrot.lane.b32.xlu0 %v727, 64
  %v735 = vpop.permute.xlu0 %734
  %737 = vst.msk [vmem:[#allocation3] sm:$0xff] %vm191, %v735
  %v738 = vld [vmem:[#allocation5] sm:$0xff]
  %v739 = vadd.f32 %v738, %v735
  %740 = vst.msk [vmem:[#allocation5] sm:$0xff] %vm191, %v739
  %v741 = vld [vmem:[#allocation2 + $0x30] sm:$0xff]
  %v742 = vld [vmem:[#allocation2 + $0x38] sm:$0xff]
  %v743 = vld [vmem:[#allocation3] sm:$0xff]
  %v745 = vsel %vm191, %v743, 0
  %747 = vmatpush.msra.mxu0 0.0
  %748 = vmatpush.msra.mxu0 0.0
  %749 = vmatpush.msra.mxu0 0.0
  %750 = vmatpush.msra.mxu0 0.0
  %751 = vmatpush.msra.mxu0 0.0
  %752 = vmatpush.msra.mxu0 0.0
  %753 = vmatpush.msra.mxu0 0.0
  %754 = vmatpush.msra.mxu0 0.0
  %755 = vmatpush.msra.mxu0 %v397
  %756 = vmatpush.msra.mxu0 %v395
  %757 = vmatpush.msra.mxu0 %v393
  %758 = vmatpush.msra.mxu0 %v391
  %759 = vmatpush.msra.mxu0 %v389
  %760 = vmatpush.msra.mxu0 %v387
  %761 = vmatpush.msra.mxu0 %v385
  %762 = vmatpush.msra.mxu0 %v383
  %763 = vmatmul.f32.gmra.mxu0 %v745
  %v764 = vpop.f32.mrf.mxu0
  %v765 = vadd.f32 0.0, %v764
  %766 = vdwg.mxu0
  %767 = vmatpush.msra.mxu0 0.0
  %768 = vmatpush.msra.mxu0 0.0
  %769 = vmatpush.msra.mxu0 0.0
  %770 = vmatpush.msra.mxu0 0.0
  %771 = vmatpush.msra.mxu0 0.0
  %772 = vmatpush.msra.mxu0 0.0
  %773 = vmatpush.msra.mxu0 0.0
  %774 = vmatpush.msra.mxu0 0.0
  %775 = vmatpush.msra.mxu0 %v398
  %776 = vmatpush.msra.mxu0 %v396
  %777 = vmatpush.msra.mxu0 %v394
  %778 = vmatpush.msra.mxu0 %v392
  %779 = vmatpush.msra.mxu0 %v390
  %780 = vmatpush.msra.mxu0 %v388
  %781 = vmatpush.msra.mxu0 %v386
  %782 = vmatpush.msra.mxu0 %v384
  %783 = vmatmul.f32.gmra.mxu0 %v745
  %v784 = vpop.f32.mrf.mxu0
  %v785 = vadd.f32 0.0, %v784
  %786 = vdwg.mxu0
  %v787 = vadd.f32 %v741, %v765
  %v788 = vadd.f32 %v742, %v785
  %v789 = vxor.u32 %v787, 2147483648
  %v790 = vxor.u32 %v788, 2147483648
  %v791 = vmul.f32 %v789, 1.442695
  %v792 = vpow.pop %v791
  %v793 = vmul.f32 %v790, 1.442695
  %v794 = vpow.pop %v793
  %v795 = vadd.f32 %v792, 1.0
  %v796 = vadd.f32 %v794, 1.0
  %v797 = vrcp.pop %v795
  %v798 = vmul.f32 %v795, %v797
  %v799 = vsub.f32 1.0, %v798
  %v800 = vmul.f32 %v797, %v799
  %v801 = vadd.f32 %v797, %v800
  %vm802 = vweird.f32 %v795
  %vm803 = vweird.f32 %v797
  %vm804 = vmor %vm802, %vm803
  %v805 = vsel %vm804, %v797, %v801
  %v806 = vand.u32 2147483647, %v795
  %vm807 = vcmp.eq.f32.partialorder %v806, 8.507059e+37
  %v808 = vand.u32 %v795, 2147483648
  %v809 = vor.u32 1.1754944e-38, %v808
  %v810 = vsel %vm807, %v809, %v805
  %v811 = vmul.f32 1.0, %v810
  %v812 = vrcp.pop %v796
  %v813 = vmul.f32 %v796, %v812
  %v814 = vsub.f32 1.0, %v813
  %v815 = vmul.f32 %v812, %v814
  %v816 = vadd.f32 %v812, %v815
  %vm817 = vweird.f32 %v796
  %vm818 = vweird.f32 %v812
  %vm819 = vmor %vm817, %vm818
  %v820 = vsel %vm819, %v812, %v816
  %v821 = vand.u32 2147483647, %v796
  %vm822 = vcmp.eq.f32.partialorder %v821, 8.507059e+37
  %v823 = vand.u32 %v796, 2147483648
  %v824 = vor.u32 1.1754944e-38, %v823
  %v825 = vsel %vm822, %v824, %v820
  %v826 = vmul.f32 1.0, %v825
  %v827 = vtanh.pop %v788
  %v828 = vld [vmem:[#allocation4] sm:$0xff]
  %830 = vrot.lane.b32.xlu0 %v828, 64
  %v831 = vpop.permute.xlu0 %830
  %v833 = vmul.f32 %v811, %v831
  %v834 = vmul.f32 %v811, %v827
  %836 = vrot.lane.b32.xlu0 %v834, 64
  %v837 = vpop.permute.xlu0 %836
  %v839 = vadd.f32 %v833, %v837
  %v840 = vtanh.pop %v839
  %v841 = vmul.f32 %v826, %v840
  %843 = vrot.lane.b32.xlu0 %v839, 64
  %v844 = vpop.permute.xlu0 %843
  %846 = vst.msk [vmem:[#allocation4] sm:$0xff] %vm191, %v844
  %848 = vrot.lane.b32.xlu0 %v841, 64
  %v849 = vpop.permute.xlu0 %848
  %851 = vst.msk [vmem:[#allocation3] sm:$0xff] %vm191, %v849
  %v852 = vld [vmem:[#allocation5] sm:$0xff]
  %v853 = vadd.f32 %v852, %v849
  %854 = vst.msk [vmem:[#allocation5] sm:$0xff] %vm191, %v853
  %v855 = vld [vmem:[#allocation2 + $0x40] sm:$0xff]
  %v856 = vld [vmem:[#allocation2 + $0x48] sm:$0xff]
  %v857 = vld [vmem:[#allocation3] sm:$0xff]
  %v859 = vsel %vm191, %v857, 0
  %861 = vmatpush.msra.mxu0 0.0
  %862 = vmatpush.msra.mxu0 0.0
  %863 = vmatpush.msra.mxu0 0.0
  %864 = vmatpush.msra.mxu0 0.0
  %865 = vmatpush.msra.mxu0 0.0
  %866 = vmatpush.msra.mxu0 0.0
  %867 = vmatpush.msra.mxu0 0.0
  %868 = vmatpush.msra.mxu0 0.0
  %869 = vmatpush.msra.mxu0 %v397
  %870 = vmatpush.msra.mxu0 %v395
  %871 = vmatpush.msra.mxu0 %v393
  %872 = vmatpush.msra.mxu0 %v391
  %873 = vmatpush.msra.mxu0 %v389
  %874 = vmatpush.msra.mxu0 %v387
  %875 = vmatpush.msra.mxu0 %v385
  %876 = vmatpush.msra.mxu0 %v383
  %877 = vmatmul.f32.gmra.mxu0 %v859
  %v878 = vpop.f32.mrf.mxu0
  %v879 = vadd.f32 0.0, %v878
  %880 = vdwg.mxu0
  %881 = vmatpush.msra.mxu0 0.0
  %882 = vmatpush.msra.mxu0 0.0
  %883 = vmatpush.msra.mxu0 0.0
  %884 = vmatpush.msra.mxu0 0.0
  %885 = vmatpush.msra.mxu0 0.0
  %886 = vmatpush.msra.mxu0 0.0
  %887 = vmatpush.msra.mxu0 0.0
  %888 = vmatpush.msra.mxu0 0.0
  %889 = vmatpush.msra.mxu0 %v398
  %890 = vmatpush.msra.mxu0 %v396
  %891 = vmatpush.msra.mxu0 %v394
  %892 = vmatpush.msra.mxu0 %v392
  %893 = vmatpush.msra.mxu0 %v390
  %894 = vmatpush.msra.mxu0 %v388
  %895 = vmatpush.msra.mxu0 %v386
  %896 = vmatpush.msra.mxu0 %v384
  %897 = vmatmul.f32.gmra.mxu0 %v859
  %v898 = vpop.f32.mrf.mxu0
  %v899 = vadd.f32 0.0, %v898
  %900 = vdwg.mxu0
  %v901 = vadd.f32 %v855, %v879
  %v902 = vadd.f32 %v856, %v899
  %v903 = vxor.u32 %v901, 2147483648
  %v904 = vxor.u32 %v902, 2147483648
  %v905 = vmul.f32 %v903, 1.442695
  %v906 = vpow.pop %v905
  %v907 = vmul.f32 %v904, 1.442695
  %v908 = vpow.pop %v907
  %v909 = vadd.f32 %v906, 1.0
  %v910 = vadd.f32 %v908, 1.0
  %v911 = vrcp.pop %v909
  %v912 = vmul.f32 %v909, %v911
  %v913 = vsub.f32 1.0, %v912
  %v914 = vmul.f32 %v911, %v913
  %v915 = vadd.f32 %v911, %v914
  %vm916 = vweird.f32 %v909
  %vm917 = vweird.f32 %v911
  %vm918 = vmor %vm916, %vm917
  %v919 = vsel %vm918, %v911, %v915
  %v920 = vand.u32 2147483647, %v909
  %vm921 = vcmp.eq.f32.partialorder %v920, 8.507059e+37
  %v922 = vand.u32 %v909, 2147483648
  %v923 = vor.u32 1.1754944e-38, %v922
  %v924 = vsel %vm921, %v923, %v919
  %v925 = vmul.f32 1.0, %v924
  %v926 = vrcp.pop %v910
  %v927 = vmul.f32 %v910, %v926
  %v928 = vsub.f32 1.0, %v927
  %v929 = vmul.f32 %v926, %v928
  %v930 = vadd.f32 %v926, %v929
  %vm931 = vweird.f32 %v910
  %vm932 = vweird.f32 %v926
  %vm933 = vmor %vm931, %vm932
  %v934 = vsel %vm933, %v926, %v930
  %v935 = vand.u32 2147483647, %v910
  %vm936 = vcmp.eq.f32.partialorder %v935, 8.507059e+37
  %v937 = vand.u32 %v910, 2147483648
  %v938 = vor.u32 1.1754944e-38, %v937
  %v939 = vsel %vm936, %v938, %v934
  %v940 = vmul.f32 1.0, %v939
  %v941 = vtanh.pop %v902
  %v942 = vld [vmem:[#allocation4] sm:$0xff]
  %944 = vrot.lane.b32.xlu0 %v942, 64
  %v945 = vpop.permute.xlu0 %944
  %v947 = vmul.f32 %v925, %v945
  %v948 = vmul.f32 %v925, %v941
  %950 = vrot.lane.b32.xlu0 %v948, 64
  %v951 = vpop.permute.xlu0 %950
  %v953 = vadd.f32 %v947, %v951
  %v954 = vtanh.pop %v953
  %v955 = vmul.f32 %v940, %v954
  %957 = vrot.lane.b32.xlu0 %v953, 64
  %v958 = vpop.permute.xlu0 %957
  %960 = vst.msk [vmem:[#allocation4] sm:$0xff] %vm191, %v958
  %962 = vrot.lane.b32.xlu0 %v955, 64
  %v963 = vpop.permute.xlu0 %962
  %965 = vst.msk [vmem:[#allocation3] sm:$0xff] %vm191, %v963
  %v966 = vld [vmem:[#allocation5] sm:$0xff]
  %v967 = vadd.f32 %v966, %v963
  %968 = vst.msk [vmem:[#allocation5] sm:$0xff] %vm191, %v967
  %v969 = vld [vmem:[#allocation2 + $0x50] sm:$0xff]
  %v970 = vld [vmem:[#allocation2 + $0x58] sm:$0xff]
  %v971 = vld [vmem:[#allocation3] sm:$0xff]
  %v973 = vsel %vm191, %v971, 0
  %975 = vmatpush.msra.mxu0 0.0
  %976 = vmatpush.msra.mxu0 0.0
  %977 = vmatpush.msra.mxu0 0.0
  %978 = vmatpush.msra.mxu0 0.0
  %979 = vmatpush.msra.mxu0 0.0
  %980 = vmatpush.msra.mxu0 0.0
  %981 = vmatpush.msra.mxu0 0.0
  %982 = vmatpush.msra.mxu0 0.0
  %983 = vmatpush.msra.mxu0 %v397
  %984 = vmatpush.msra.mxu0 %v395
  %985 = vmatpush.msra.mxu0 %v393
  %986 = vmatpush.msra.mxu0 %v391
  %987 = vmatpush.msra.mxu0 %v389
  %988 = vmatpush.msra.mxu0 %v387
  %989 = vmatpush.msra.mxu0 %v385
  %990 = vmatpush.msra.mxu0 %v383
  %991 = vmatmul.f32.gmra.mxu0 %v973
  %v992 = vpop.f32.mrf.mxu0
  %v993 = vadd.f32 0.0, %v992
  %994 = vdwg.mxu0
  %995 = vmatpush.msra.mxu0 0.0
  %996 = vmatpush.msra.mxu0 0.0
  %997 = vmatpush.msra.mxu0 0.0
  %998 = vmatpush.msra.mxu0 0.0
  %999 = vmatpush.msra.mxu0 0.0
  %1000 = vmatpush.msra.mxu0 0.0
  %1001 = vmatpush.msra.mxu0 0.0
  %1002 = vmatpush.msra.mxu0 0.0
  %1003 = vmatpush.msra.mxu0 %v398
  %1004 = vmatpush.msra.mxu0 %v396
  %1005 = vmatpush.msra.mxu0 %v394
  %1006 = vmatpush.msra.mxu0 %v392
  %1007 = vmatpush.msra.mxu0 %v390
  %1008 = vmatpush.msra.mxu0 %v388
  %1009 = vmatpush.msra.mxu0 %v386
  %1010 = vmatpush.msra.mxu0 %v384
  %1011 = vmatmul.f32.gmra.mxu0 %v973
  %v1012 = vpop.f32.mrf.mxu0
  %v1013 = vadd.f32 0.0, %v1012
  %1014 = vdwg.mxu0
  %v1015 = vadd.f32 %v969, %v993
  %v1016 = vadd.f32 %v970, %v1013
  %v1017 = vxor.u32 %v1015, 2147483648
  %v1018 = vxor.u32 %v1016, 2147483648
  %v1019 = vmul.f32 %v1017, 1.442695
  %v1020 = vpow.pop %v1019
  %v1021 = vmul.f32 %v1018, 1.442695
  %v1022 = vpow.pop %v1021
  %v1023 = vadd.f32 %v1020, 1.0
  %v1024 = vadd.f32 %v1022, 1.0
  %v1025 = vrcp.pop %v1023
  %v1026 = vmul.f32 %v1023, %v1025
  %v1027 = vsub.f32 1.0, %v1026
  %v1028 = vmul.f32 %v1025, %v1027
  %v1029 = vadd.f32 %v1025, %v1028
  %vm1030 = vweird.f32 %v1023
  %vm1031 = vweird.f32 %v1025
  %vm1032 = vmor %vm1030, %vm1031
  %v1033 = vsel %vm1032, %v1025, %v1029
  %v1034 = vand.u32 2147483647, %v1023
  %vm1035 = vcmp.eq.f32.partialorder %v1034, 8.507059e+37
  %v1036 = vand.u32 %v1023, 2147483648
  %v1037 = vor.u32 1.1754944e-38, %v1036
  %v1038 = vsel %vm1035, %v1037, %v1033
  %v1039 = vmul.f32 1.0, %v1038
  %v1040 = vrcp.pop %v1024
  %v1041 = vmul.f32 %v1024, %v1040
  %v1042 = vsub.f32 1.0, %v1041
  %v1043 = vmul.f32 %v1040, %v1042
  %v1044 = vadd.f32 %v1040, %v1043
  %vm1045 = vweird.f32 %v1024
  %vm1046 = vweird.f32 %v1040
  %vm1047 = vmor %vm1045, %vm1046
  %v1048 = vsel %vm1047, %v1040, %v1044
  %v1049 = vand.u32 2147483647, %v1024
  %vm1050 = vcmp.eq.f32.partialorder %v1049, 8.507059e+37
  %v1051 = vand.u32 %v1024, 2147483648
  %v1052 = vor.u32 1.1754944e-38, %v1051
  %v1053 = vsel %vm1050, %v1052, %v1048
  %v1054 = vmul.f32 1.0, %v1053
  %v1055 = vtanh.pop %v1016
  %v1056 = vld [vmem:[#allocation4] sm:$0xff]
  %1058 = vrot.lane.b32.xlu0 %v1056, 64
  %v1059 = vpop.permute.xlu0 %1058
  %v1061 = vmul.f32 %v1039, %v1059
  %v1062 = vmul.f32 %v1039, %v1055
  %1064 = vrot.lane.b32.xlu0 %v1062, 64
  %v1065 = vpop.permute.xlu0 %1064
  %v1067 = vadd.f32 %v1061, %v1065
  %v1068 = vtanh.pop %v1067
  %v1069 = vmul.f32 %v1054, %v1068
  %1071 = vrot.lane.b32.xlu0 %v1067, 64
  %v1072 = vpop.permute.xlu0 %1071
  %1074 = vst.msk [vmem:[#allocation4] sm:$0xff] %vm191, %v1072
  %1076 = vrot.lane.b32.xlu0 %v1069, 64
  %v1077 = vpop.permute.xlu0 %1076
  %1079 = vst.msk [vmem:[#allocation3] sm:$0xff] %vm191, %v1077
  %v1080 = vld [vmem:[#allocation5] sm:$0xff]
  %v1081 = vadd.f32 %v1080, %v1077
  %1082 = vst.msk [vmem:[#allocation5] sm:$0xff] %vm191, %v1081
  %v1083 = vld [vmem:[#allocation2 + $0x60] sm:$0xff]
  %v1084 = vld [vmem:[#allocation2 + $0x68] sm:$0xff]
  %v1085 = vld [vmem:[#allocation3] sm:$0xff]
  %v1087 = vsel %vm191, %v1085, 0
  %1089 = vmatpush.msra.mxu0 0.0
  %1090 = vmatpush.msra.mxu0 0.0
  %1091 = vmatpush.msra.mxu0 0.0
  %1092 = vmatpush.msra.mxu0 0.0
  %1093 = vmatpush.msra.mxu0 0.0
  %1094 = vmatpush.msra.mxu0 0.0
  %1095 = vmatpush.msra.mxu0 0.0
  %1096 = vmatpush.msra.mxu0 0.0
  %1097 = vmatpush.msra.mxu0 %v397
  %1098 = vmatpush.msra.mxu0 %v395
  %1099 = vmatpush.msra.mxu0 %v393
  %1100 = vmatpush.msra.mxu0 %v391
  %1101 = vmatpush.msra.mxu0 %v389
  %1102 = vmatpush.msra.mxu0 %v387
  %1103 = vmatpush.msra.mxu0 %v385
  %1104 = vmatpush.msra.mxu0 %v383
  %1105 = vmatmul.f32.gmra.mxu0 %v1087
  %v1106 = vpop.f32.mrf.mxu0
  %v1107 = vadd.f32 0.0, %v1106
  %1108 = vdwg.mxu0
  %1109 = vmatpush.msra.mxu0 0.0
  %1110 = vmatpush.msra.mxu0 0.0
  %1111 = vmatpush.msra.mxu0 0.0
  %1112 = vmatpush.msra.mxu0 0.0
  %1113 = vmatpush.msra.mxu0 0.0
  %1114 = vmatpush.msra.mxu0 0.0
  %1115 = vmatpush.msra.mxu0 0.0
  %1116 = vmatpush.msra.mxu0 0.0
  %1117 = vmatpush.msra.mxu0 %v398
  %1118 = vmatpush.msra.mxu0 %v396
  %1119 = vmatpush.msra.mxu0 %v394
  %1120 = vmatpush.msra.mxu0 %v392
  %1121 = vmatpush.msra.mxu0 %v390
  %1122 = vmatpush.msra.mxu0 %v388
  %1123 = vmatpush.msra.mxu0 %v386
  %1124 = vmatpush.msra.mxu0 %v384
  %1125 = vmatmul.f32.gmra.mxu0 %v1087
  %v1126 = vpop.f32.mrf.mxu0
  %v1127 = vadd.f32 0.0, %v1126
  %1128 = vdwg.mxu0
  %v1129 = vadd.f32 %v1083, %v1107
  %v1130 = vadd.f32 %v1084, %v1127
  %v1131 = vxor.u32 %v1129, 2147483648
  %v1132 = vxor.u32 %v1130, 2147483648
  %v1133 = vmul.f32 %v1131, 1.442695
  %v1134 = vpow.pop %v1133
  %v1135 = vmul.f32 %v1132, 1.442695
  %v1136 = vpow.pop %v1135
  %v1137 = vadd.f32 %v1134, 1.0
  %v1138 = vadd.f32 %v1136, 1.0
  %v1139 = vrcp.pop %v1137
  %v1140 = vmul.f32 %v1137, %v1139
  %v1141 = vsub.f32 1.0, %v1140
  %v1142 = vmul.f32 %v1139, %v1141
  %v1143 = vadd.f32 %v1139, %v1142
  %vm1144 = vweird.f32 %v1137
  %vm1145 = vweird.f32 %v1139
  %vm1146 = vmor %vm1144, %vm1145
  %v1147 = vsel %vm1146, %v1139, %v1143
  %v1148 = vand.u32 2147483647, %v1137
  %vm1149 = vcmp.eq.f32.partialorder %v1148, 8.507059e+37
  %v1150 = vand.u32 %v1137, 2147483648
  %v1151 = vor.u32 1.1754944e-38, %v1150
  %v1152 = vsel %vm1149, %v1151, %v1147
  %v1153 = vmul.f32 1.0, %v1152
  %v1154 = vrcp.pop %v1138
  %v1155 = vmul.f32 %v1138, %v1154
  %v1156 = vsub.f32 1.0, %v1155
  %v1157 = vmul.f32 %v1154, %v1156
  %v1158 = vadd.f32 %v1154, %v1157
  %vm1159 = vweird.f32 %v1138
  %vm1160 = vweird.f32 %v1154
  %vm1161 = vmor %vm1159, %vm1160
  %v1162 = vsel %vm1161, %v1154, %v1158
  %v1163 = vand.u32 2147483647, %v1138
  %vm1164 = vcmp.eq.f32.partialorder %v1163, 8.507059e+37
  %v1165 = vand.u32 %v1138, 2147483648
  %v1166 = vor.u32 1.1754944e-38, %v1165
  %v1167 = vsel %vm1164, %v1166, %v1162
  %v1168 = vmul.f32 1.0, %v1167
  %v1169 = vtanh.pop %v1130
  %v1170 = vld [vmem:[#allocation4] sm:$0xff]
  %1172 = vrot.lane.b32.xlu0 %v1170, 64
  %v1173 = vpop.permute.xlu0 %1172
  %v1175 = vmul.f32 %v1153, %v1173
  %v1176 = vmul.f32 %v1153, %v1169
  %1178 = vrot.lane.b32.xlu0 %v1176, 64
  %v1179 = vpop.permute.xlu0 %1178
  %v1181 = vadd.f32 %v1175, %v1179
  %v1182 = vtanh.pop %v1181
  %v1183 = vmul.f32 %v1168, %v1182
  %1185 = vrot.lane.b32.xlu0 %v1181, 64
  %v1186 = vpop.permute.xlu0 %1185
  %1188 = vst.msk [vmem:[#allocation4] sm:$0xff] %vm191, %v1186
  %1190 = vrot.lane.b32.xlu0 %v1183, 64
  %v1191 = vpop.permute.xlu0 %1190
  %1193 = vst.msk [vmem:[#allocation3] sm:$0xff] %vm191, %v1191
  %v1194 = vld [vmem:[#allocation5] sm:$0xff]
  %v1195 = vadd.f32 %v1194, %v1191
  %1196 = vst.msk [vmem:[#allocation5] sm:$0xff] %vm191, %v1195
  %v1197 = vld [vmem:[#allocation2 + $0x70] sm:$0xff]
  %v1198 = vld [vmem:[#allocation2 + $0x78] sm:$0xff]
  %v1199 = vld [vmem:[#allocation3] sm:$0xff]
  %v1201 = vsel %vm191, %v1199, 0
  %1203 = vmatpush.msra.mxu0 0.0
  %1204 = vmatpush.msra.mxu0 0.0
  %1205 = vmatpush.msra.mxu0 0.0
  %1206 = vmatpush.msra.mxu0 0.0
  %1207 = vmatpush.msra.mxu0 0.0
  %1208 = vmatpush.msra.mxu0 0.0
  %1209 = vmatpush.msra.mxu0 0.0
  %1210 = vmatpush.msra.mxu0 0.0
  %1211 = vmatpush.msra.mxu0 %v397
  %1212 = vmatpush.msra.mxu0 %v395
  %1213 = vmatpush.msra.mxu0 %v393
  %1214 = vmatpush.msra.mxu0 %v391
  %1215 = vmatpush.msra.mxu0 %v389
  %1216 = vmatpush.msra.mxu0 %v387
  %1217 = vmatpush.msra.mxu0 %v385
  %1218 = vmatpush.msra.mxu0 %v383
  %1219 = vmatmul.f32.gmra.mxu0 %v1201
  %v1220 = vpop.f32.mrf.mxu0
  %v1221 = vadd.f32 0.0, %v1220
  %1222 = vdwg.mxu0
  %1223 = vmatpush.msra.mxu0 0.0
  %1224 = vmatpush.msra.mxu0 0.0
  %1225 = vmatpush.msra.mxu0 0.0
  %1226 = vmatpush.msra.mxu0 0.0
  %1227 = vmatpush.msra.mxu0 0.0
  %1228 = vmatpush.msra.mxu0 0.0
  %1229 = vmatpush.msra.mxu0 0.0
  %1230 = vmatpush.msra.mxu0 0.0
  %1231 = vmatpush.msra.mxu0 %v398
  %1232 = vmatpush.msra.mxu0 %v396
  %1233 = vmatpush.msra.mxu0 %v394
  %1234 = vmatpush.msra.mxu0 %v392
  %1235 = vmatpush.msra.mxu0 %v390
  %1236 = vmatpush.msra.mxu0 %v388
  %1237 = vmatpush.msra.mxu0 %v386
  %1238 = vmatpush.msra.mxu0 %v384
  %1239 = vmatmul.f32.gmra.mxu0 %v1201
  %v1240 = vpop.f32.mrf.mxu0
  %v1241 = vadd.f32 0.0, %v1240
  %1242 = vdwg.mxu0
  %v1243 = vadd.f32 %v1197, %v1221
  %v1244 = vadd.f32 %v1198, %v1241
  %v1245 = vxor.u32 %v1243, 2147483648
  %v1246 = vxor.u32 %v1244, 2147483648
  %v1247 = vmul.f32 %v1245, 1.442695
  %v1248 = vpow.pop %v1247
  %v1249 = vmul.f32 %v1246, 1.442695
  %v1250 = vpow.pop %v1249
  %v1251 = vadd.f32 %v1248, 1.0
  %v1252 = vadd.f32 %v1250, 1.0
  %v1253 = vrcp.pop %v1251
  %v1254 = vmul.f32 %v1251, %v1253
  %v1255 = vsub.f32 1.0, %v1254
  %v1256 = vmul.f32 %v1253, %v1255
  %v1257 = vadd.f32 %v1253, %v1256
  %vm1258 = vweird.f32 %v1251
  %vm1259 = vweird.f32 %v1253
  %vm1260 = vmor %vm1258, %vm1259
  %v1261 = vsel %vm1260, %v1253, %v1257
  %v1262 = vand.u32 2147483647, %v1251
  %vm1263 = vcmp.eq.f32.partialorder %v1262, 8.507059e+37
  %v1264 = vand.u32 %v1251, 2147483648
  %v1265 = vor.u32 1.1754944e-38, %v1264
  %v1266 = vsel %vm1263, %v1265, %v1261
  %v1267 = vmul.f32 1.0, %v1266
  %v1268 = vrcp.pop %v1252
  %v1269 = vmul.f32 %v1252, %v1268
  %v1270 = vsub.f32 1.0, %v1269
  %v1271 = vmul.f32 %v1268, %v1270
  %v1272 = vadd.f32 %v1268, %v1271
  %vm1273 = vweird.f32 %v1252
  %vm1274 = vweird.f32 %v1268
  %vm1275 = vmor %vm1273, %vm1274
  %v1276 = vsel %vm1275, %v1268, %v1272
  %v1277 = vand.u32 2147483647, %v1252
  %vm1278 = vcmp.eq.f32.partialorder %v1277, 8.507059e+37
  %v1279 = vand.u32 %v1252, 2147483648
  %v1280 = vor.u32 1.1754944e-38, %v1279
  %v1281 = vsel %vm1278, %v1280, %v1276
  %v1282 = vmul.f32 1.0, %v1281
  %v1283 = vtanh.pop %v1244
  %v1284 = vld [vmem:[#allocation4] sm:$0xff]
  %1286 = vrot.lane.b32.xlu0 %v1284, 64
  %v1287 = vpop.permute.xlu0 %1286
  %v1289 = vmul.f32 %v1267, %v1287
  %v1290 = vmul.f32 %v1267, %v1283
  %1292 = vrot.lane.b32.xlu0 %v1290, 64
  %v1293 = vpop.permute.xlu0 %1292
  %v1295 = vadd.f32 %v1289, %v1293
  %v1296 = vtanh.pop %v1295
  %v1297 = vmul.f32 %v1282, %v1296
  %1299 = vrot.lane.b32.xlu0 %v1295, 64
  %v1300 = vpop.permute.xlu0 %1299
  %1302 = vst.msk [vmem:[#allocation4] sm:$0xff] %vm191, %v1300
  %1304 = vrot.lane.b32.xlu0 %v1297, 64
  %v1305 = vpop.permute.xlu0 %1304
  %1307 = vst.msk [vmem:[#allocation3] sm:$0xff] %vm191, %v1305
  %v1308 = vld [vmem:[#allocation5] sm:$0xff]
  %v1309 = vadd.f32 %v1308, %v1305
  %1310 = vst.msk [vmem:[#allocation5] sm:$0xff] %vm191, %v1309
  %v1311 = vld [vmem:[#allocation2 + $0x80] sm:$0xff]
  %v1312 = vld [vmem:[#allocation2 + $0x88] sm:$0xff]
  %v1313 = vld [vmem:[#allocation3] sm:$0xff]
  %v1315 = vsel %vm191, %v1313, 0
  %1317 = vmatpush.msra.mxu0 0.0
  %1318 = vmatpush.msra.mxu0 0.0
  %1319 = vmatpush.msra.mxu0 0.0
  %1320 = vmatpush.msra.mxu0 0.0
  %1321 = vmatpush.msra.mxu0 0.0
  %1322 = vmatpush.msra.mxu0 0.0
  %1323 = vmatpush.msra.mxu0 0.0
  %1324 = vmatpush.msra.mxu0 0.0
  %1325 = vmatpush.msra.mxu0 %v397
  %1326 = vmatpush.msra.mxu0 %v395
  %1327 = vmatpush.msra.mxu0 %v393
  %1328 = vmatpush.msra.mxu0 %v391
  %1329 = vmatpush.msra.mxu0 %v389
  %1330 = vmatpush.msra.mxu0 %v387
  %1331 = vmatpush.msra.mxu0 %v385
  %1332 = vmatpush.msra.mxu0 %v383
  %1333 = vmatmul.f32.gmra.mxu0 %v1315
  %v1334 = vpop.f32.mrf.mxu0
  %v1335 = vadd.f32 0.0, %v1334
  %1336 = vdwg.mxu0
  %1337 = vmatpush.msra.mxu0 0.0
  %1338 = vmatpush.msra.mxu0 0.0
  %1339 = vmatpush.msra.mxu0 0.0
  %1340 = vmatpush.msra.mxu0 0.0
  %1341 = vmatpush.msra.mxu0 0.0
  %1342 = vmatpush.msra.mxu0 0.0
  %1343 = vmatpush.msra.mxu0 0.0
  %1344 = vmatpush.msra.mxu0 0.0
  %1345 = vmatpush.msra.mxu0 %v398
  %1346 = vmatpush.msra.mxu0 %v396
  %1347 = vmatpush.msra.mxu0 %v394
  %1348 = vmatpush.msra.mxu0 %v392
  %1349 = vmatpush.msra.mxu0 %v390
  %1350 = vmatpush.msra.mxu0 %v388
  %1351 = vmatpush.msra.mxu0 %v386
  %1352 = vmatpush.msra.mxu0 %v384
  %1353 = vmatmul.f32.gmra.mxu0 %v1315
  %v1354 = vpop.f32.mrf.mxu0
  %v1355 = vadd.f32 0.0, %v1354
  %1356 = vdwg.mxu0
  %v1357 = vadd.f32 %v1311, %v1335
  %v1358 = vadd.f32 %v1312, %v1355
  %v1359 = vxor.u32 %v1357, 2147483648
  %v1360 = vxor.u32 %v1358, 2147483648
  %v1361 = vmul.f32 %v1359, 1.442695
  %v1362 = vpow.pop %v1361
  %v1363 = vmul.f32 %v1360, 1.442695
  %v1364 = vpow.pop %v1363
  %v1365 = vadd.f32 %v1362, 1.0
  %v1366 = vadd.f32 %v1364, 1.0
  %v1367 = vrcp.pop %v1365
  %v1368 = vmul.f32 %v1365, %v1367
  %v1369 = vsub.f32 1.0, %v1368
  %v1370 = vmul.f32 %v1367, %v1369
  %v1371 = vadd.f32 %v1367, %v1370
  %vm1372 = vweird.f32 %v1365
  %vm1373 = vweird.f32 %v1367
  %vm1374 = vmor %vm1372, %vm1373
  %v1375 = vsel %vm1374, %v1367, %v1371
  %v1376 = vand.u32 2147483647, %v1365
  %vm1377 = vcmp.eq.f32.partialorder %v1376, 8.507059e+37
  %v1378 = vand.u32 %v1365, 2147483648
  %v1379 = vor.u32 1.1754944e-38, %v1378
  %v1380 = vsel %vm1377, %v1379, %v1375
  %v1381 = vmul.f32 1.0, %v1380
  %v1382 = vrcp.pop %v1366
  %v1383 = vmul.f32 %v1366, %v1382
  %v1384 = vsub.f32 1.0, %v1383
  %v1385 = vmul.f32 %v1382, %v1384
  %v1386 = vadd.f32 %v1382, %v1385
  %vm1387 = vweird.f32 %v1366
  %vm1388 = vweird.f32 %v1382
  %vm1389 = vmor %vm1387, %vm1388
  %v1390 = vsel %vm1389, %v1382, %v1386
  %v1391 = vand.u32 2147483647, %v1366
  %vm1392 = vcmp.eq.f32.partialorder %v1391, 8.507059e+37
  %v1393 = vand.u32 %v1366, 2147483648
  %v1394 = vor.u32 1.1754944e-38, %v1393
  %v1395 = vsel %vm1392, %v1394, %v1390
  %v1396 = vmul.f32 1.0, %v1395
  %v1397 = vtanh.pop %v1358
  %v1398 = vld [vmem:[#allocation4] sm:$0xff]
  %1400 = vrot.lane.b32.xlu0 %v1398, 64
  %v1401 = vpop.permute.xlu0 %1400
  %v1403 = vmul.f32 %v1381, %v1401
  %v1404 = vmul.f32 %v1381, %v1397
  %1406 = vrot.lane.b32.xlu0 %v1404, 64
  %v1407 = vpop.permute.xlu0 %1406
  %v1409 = vadd.f32 %v1403, %v1407
  %v1410 = vtanh.pop %v1409
  %v1411 = vmul.f32 %v1396, %v1410
  %1413 = vrot.lane.b32.xlu0 %v1409, 64
  %v1414 = vpop.permute.xlu0 %1413
  %1416 = vst.msk [vmem:[#allocation4] sm:$0xff] %vm191, %v1414
  %1418 = vrot.lane.b32.xlu0 %v1411, 64
  %v1419 = vpop.permute.xlu0 %1418
  %1421 = vst.msk [vmem:[#allocation3] sm:$0xff] %vm191, %v1419
  %v1422 = vld [vmem:[#allocation5] sm:$0xff]
  %v1423 = vadd.f32 %v1422, %v1419
  %1424 = vst.msk [vmem:[#allocation5] sm:$0xff] %vm191, %v1423
  %v1425 = vld [vmem:[#allocation2 + $0x90] sm:$0xff]
  %v1426 = vld [vmem:[#allocation2 + $0x98] sm:$0xff]
  %v1427 = vld [vmem:[#allocation3] sm:$0xff]
  %v1429 = vsel %vm191, %v1427, 0
  %1431 = vmatpush.msra.mxu0 0.0
  %1432 = vmatpush.msra.mxu0 0.0
  %1433 = vmatpush.msra.mxu0 0.0
  %1434 = vmatpush.msra.mxu0 0.0
  %1435 = vmatpush.msra.mxu0 0.0
  %1436 = vmatpush.msra.mxu0 0.0
  %1437 = vmatpush.msra.mxu0 0.0
  %1438 = vmatpush.msra.mxu0 0.0
  %1439 = vmatpush.msra.mxu0 %v397
  %1440 = vmatpush.msra.mxu0 %v395
  %1441 = vmatpush.msra.mxu0 %v393
  %1442 = vmatpush.msra.mxu0 %v391
  %1443 = vmatpush.msra.mxu0 %v389
  %1444 = vmatpush.msra.mxu0 %v387
  %1445 = vmatpush.msra.mxu0 %v385
  %1446 = vmatpush.msra.mxu0 %v383
  %1447 = vmatmul.f32.gmra.mxu0 %v1429
  %v1448 = vpop.f32.mrf.mxu0
  %v1449 = vadd.f32 0.0, %v1448
  %1450 = vdwg.mxu0
  %1451 = vmatpush.msra.mxu0 0.0
  %1452 = vmatpush.msra.mxu0 0.0
  %1453 = vmatpush.msra.mxu0 0.0
  %1454 = vmatpush.msra.mxu0 0.0
  %1455 = vmatpush.msra.mxu0 0.0
  %1456 = vmatpush.msra.mxu0 0.0
  %1457 = vmatpush.msra.mxu0 0.0
  %1458 = vmatpush.msra.mxu0 0.0
  %1459 = vmatpush.msra.mxu0 %v398
  %1460 = vmatpush.msra.mxu0 %v396
  %1461 = vmatpush.msra.mxu0 %v394
  %1462 = vmatpush.msra.mxu0 %v392
  %1463 = vmatpush.msra.mxu0 %v390
  %1464 = vmatpush.msra.mxu0 %v388
  %1465 = vmatpush.msra.mxu0 %v386
  %1466 = vmatpush.msra.mxu0 %v384
  %1467 = vmatmul.f32.gmra.mxu0 %v1429
  %v1468 = vpop.f32.mrf.mxu0
  %v1469 = vadd.f32 0.0, %v1468
  %1470 = vdwg.mxu0
  %v1471 = vadd.f32 %v1425, %v1449
  %v1472 = vadd.f32 %v1426, %v1469
  %v1473 = vxor.u32 %v1471, 2147483648
  %v1474 = vxor.u32 %v1472, 2147483648
  %v1475 = vmul.f32 %v1473, 1.442695
  %v1476 = vpow.pop %v1475
  %v1477 = vmul.f32 %v1474, 1.442695
  %v1478 = vpow.pop %v1477
  %v1479 = vadd.f32 %v1476, 1.0
  %v1480 = vadd.f32 %v1478, 1.0
  %v1481 = vrcp.pop %v1479
  %v1482 = vmul.f32 %v1479, %v1481
  %v1483 = vsub.f32 1.0, %v1482
  %v1484 = vmul.f32 %v1481, %v1483
  %v1485 = vadd.f32 %v1481, %v1484
  %vm1486 = vweird.f32 %v1479
  %vm1487 = vweird.f32 %v1481
  %vm1488 = vmor %vm1486, %vm1487
  %v1489 = vsel %vm1488, %v1481, %v1485
  %v1490 = vand.u32 2147483647, %v1479
  %vm1491 = vcmp.eq.f32.partialorder %v1490, 8.507059e+37
  %v1492 = vand.u32 %v1479, 2147483648
  %v1493 = vor.u32 1.1754944e-38, %v1492
  %v1494 = vsel %vm1491, %v1493, %v1489
  %v1495 = vmul.f32 1.0, %v1494
  %v1496 = vrcp.pop %v1480
  %v1497 = vmul.f32 %v1480, %v1496
  %v1498 = vsub.f32 1.0, %v1497
  %v1499 = vmul.f32 %v1496, %v1498
  %v1500 = vadd.f32 %v1496, %v1499
  %vm1501 = vweird.f32 %v1480
  %vm1502 = vweird.f32 %v1496
  %vm1503 = vmor %vm1501, %vm1502
  %v1504 = vsel %vm1503, %v1496, %v1500
  %v1505 = vand.u32 2147483647, %v1480
  %vm1506 = vcmp.eq.f32.partialorder %v1505, 8.507059e+37
  %v1507 = vand.u32 %v1480, 2147483648
  %v1508 = vor.u32 1.1754944e-38, %v1507
  %v1509 = vsel %vm1506, %v1508, %v1504
  %v1510 = vmul.f32 1.0, %v1509
  %v1511 = vtanh.pop %v1472
  %v1512 = vld [vmem:[#allocation4] sm:$0xff]
  %1514 = vrot.lane.b32.xlu0 %v1512, 64
  %v1515 = vpop.permute.xlu0 %1514
  %v1517 = vmul.f32 %v1495, %v1515
  %v1518 = vmul.f32 %v1495, %v1511
  %1520 = vrot.lane.b32.xlu0 %v1518, 64
  %v1521 = vpop.permute.xlu0 %1520
  %v1523 = vadd.f32 %v1517, %v1521
  %v1524 = vtanh.pop %v1523
  %v1525 = vmul.f32 %v1510, %v1524
  %1527 = vrot.lane.b32.xlu0 %v1523, 64
  %v1528 = vpop.permute.xlu0 %1527
  %1530 = vst.msk [vmem:[#allocation4] sm:$0xff] %vm191, %v1528
  %1532 = vrot.lane.b32.xlu0 %v1525, 64
  %v1533 = vpop.permute.xlu0 %1532
  %1535 = vst.msk [vmem:[#allocation3] sm:$0xff] %vm191, %v1533
  %v1536 = vld [vmem:[#allocation5] sm:$0xff]
  %v1537 = vadd.f32 %v1536, %v1533
  %1538 = vst.msk [vmem:[#allocation5] sm:$0xff] %vm191, %v1537
  %v1539 = vld [vmem:[#allocation2 + $0xa0] sm:$0xff]
  %v1540 = vld [vmem:[#allocation2 + $0xa8] sm:$0xff]
  %v1541 = vld [vmem:[#allocation3] sm:$0xff]
  %v1543 = vsel %vm191, %v1541, 0
  %1545 = vmatpush.msra.mxu0 0.0
  %1546 = vmatpush.msra.mxu0 0.0
  %1547 = vmatpush.msra.mxu0 0.0
  %1548 = vmatpush.msra.mxu0 0.0
  %1549 = vmatpush.msra.mxu0 0.0
  %1550 = vmatpush.msra.mxu0 0.0
  %1551 = vmatpush.msra.mxu0 0.0
  %1552 = vmatpush.msra.mxu0 0.0
  %1553 = vmatpush.msra.mxu0 %v397
  %1554 = vmatpush.msra.mxu0 %v395
  %1555 = vmatpush.msra.mxu0 %v393
  %1556 = vmatpush.msra.mxu0 %v391
  %1557 = vmatpush.msra.mxu0 %v389
  %1558 = vmatpush.msra.mxu0 %v387
  %1559 = vmatpush.msra.mxu0 %v385
  %1560 = vmatpush.msra.mxu0 %v383
  %1561 = vmatmul.f32.gmra.mxu0 %v1543
  %v1562 = vpop.f32.mrf.mxu0
  %v1563 = vadd.f32 0.0, %v1562
  %1564 = vdwg.mxu0
  %1565 = vmatpush.msra.mxu0 0.0
  %1566 = vmatpush.msra.mxu0 0.0
  %1567 = vmatpush.msra.mxu0 0.0
  %1568 = vmatpush.msra.mxu0 0.0
  %1569 = vmatpush.msra.mxu0 0.0
  %1570 = vmatpush.msra.mxu0 0.0
  %1571 = vmatpush.msra.mxu0 0.0
  %1572 = vmatpush.msra.mxu0 0.0
  %1573 = vmatpush.msra.mxu0 %v398
  %1574 = vmatpush.msra.mxu0 %v396
  %1575 = vmatpush.msra.mxu0 %v394
  %1576 = vmatpush.msra.mxu0 %v392
  %1577 = vmatpush.msra.mxu0 %v390
  %1578 = vmatpush.msra.mxu0 %v388
  %1579 = vmatpush.msra.mxu0 %v386
  %1580 = vmatpush.msra.mxu0 %v384
  %1581 = vmatmul.f32.gmra.mxu0 %v1543
  %v1582 = vpop.f32.mrf.mxu0
  %v1583 = vadd.f32 0.0, %v1582
  %1584 = vdwg.mxu0
  %v1585 = vadd.f32 %v1539, %v1563
  %v1586 = vadd.f32 %v1540, %v1583
  %v1587 = vxor.u32 %v1585, 2147483648
  %v1588 = vxor.u32 %v1586, 2147483648
  %v1589 = vmul.f32 %v1587, 1.442695
  %v1590 = vpow.pop %v1589
  %v1591 = vmul.f32 %v1588, 1.442695
  %v1592 = vpow.pop %v1591
  %v1593 = vadd.f32 %v1590, 1.0
  %v1594 = vadd.f32 %v1592, 1.0
  %v1595 = vrcp.pop %v1593
  %v1596 = vmul.f32 %v1593, %v1595
  %v1597 = vsub.f32 1.0, %v1596
  %v1598 = vmul.f32 %v1595, %v1597
  %v1599 = vadd.f32 %v1595, %v1598
  %vm1600 = vweird.f32 %v1593
  %vm1601 = vweird.f32 %v1595
  %vm1602 = vmor %vm1600, %vm1601
  %v1603 = vsel %vm1602, %v1595, %v1599
  %v1604 = vand.u32 2147483647, %v1593
  %vm1605 = vcmp.eq.f32.partialorder %v1604, 8.507059e+37
  %v1606 = vand.u32 %v1593, 2147483648
  %v1607 = vor.u32 1.1754944e-38, %v1606
  %v1608 = vsel %vm1605, %v1607, %v1603
  %v1609 = vmul.f32 1.0, %v1608
  %v1610 = vrcp.pop %v1594
  %v1611 = vmul.f32 %v1594, %v1610
  %v1612 = vsub.f32 1.0, %v1611
  %v1613 = vmul.f32 %v1610, %v1612
  %v1614 = vadd.f32 %v1610, %v1613
  %vm1615 = vweird.f32 %v1594
  %vm1616 = vweird.f32 %v1610
  %vm1617 = vmor %vm1615, %vm1616
  %v1618 = vsel %vm1617, %v1610, %v1614
  %v1619 = vand.u32 2147483647, %v1594
  %vm1620 = vcmp.eq.f32.partialorder %v1619, 8.507059e+37
  %v1621 = vand.u32 %v1594, 2147483648
  %v1622 = vor.u32 1.1754944e-38, %v1621
  %v1623 = vsel %vm1620, %v1622, %v1618
  %v1624 = vmul.f32 1.0, %v1623
  %v1625 = vtanh.pop %v1586
  %v1626 = vld [vmem:[#allocation4] sm:$0xff]
  %1628 = vrot.lane.b32.xlu0 %v1626, 64
  %v1629 = vpop.permute.xlu0 %1628
  %v1631 = vmul.f32 %v1609, %v1629
  %v1632 = vmul.f32 %v1609, %v1625
  %1634 = vrot.lane.b32.xlu0 %v1632, 64
  %v1635 = vpop.permute.xlu0 %1634
  %v1637 = vadd.f32 %v1631, %v1635
  %v1638 = vtanh.pop %v1637
  %v1639 = vmul.f32 %v1624, %v1638
  %1641 = vrot.lane.b32.xlu0 %v1637, 64
  %v1642 = vpop.permute.xlu0 %1641
  %1644 = vst.msk [vmem:[#allocation4] sm:$0xff] %vm191, %v1642
  %1646 = vrot.lane.b32.xlu0 %v1639, 64
  %v1647 = vpop.permute.xlu0 %1646
  %1649 = vst.msk [vmem:[#allocation3] sm:$0xff] %vm191, %v1647
  %v1650 = vld [vmem:[#allocation5] sm:$0xff]
  %v1651 = vadd.f32 %v1650, %v1647
  %1652 = vst.msk [vmem:[#allocation5] sm:$0xff] %vm191, %v1651
  %v1653 = vld [vmem:[#allocation2 + $0xb0] sm:$0xff]
  %v1654 = vld [vmem:[#allocation2 + $0xb8] sm:$0xff]
  %v1655 = vld [vmem:[#allocation3] sm:$0xff]
  %v1657 = vsel %vm191, %v1655, 0
  %1659 = vmatpush.msra.mxu0 0.0
  %1660 = vmatpush.msra.mxu0 0.0
  %1661 = vmatpush.msra.mxu0 0.0
  %1662 = vmatpush.msra.mxu0 0.0
  %1663 = vmatpush.msra.mxu0 0.0
  %1664 = vmatpush.msra.mxu0 0.0
  %1665 = vmatpush.msra.mxu0 0.0
  %1666 = vmatpush.msra.mxu0 0.0
  %1667 = vmatpush.msra.mxu0 %v397
  %1668 = vmatpush.msra.mxu0 %v395
  %1669 = vmatpush.msra.mxu0 %v393
  %1670 = vmatpush.msra.mxu0 %v391
  %1671 = vmatpush.msra.mxu0 %v389
  %1672 = vmatpush.msra.mxu0 %v387
  %1673 = vmatpush.msra.mxu0 %v385
  %1674 = vmatpush.msra.mxu0 %v383
  %1675 = vmatmul.f32.gmra.mxu0 %v1657
  %v1676 = vpop.f32.mrf.mxu0
  %v1677 = vadd.f32 0.0, %v1676
  %1678 = vdwg.mxu0
  %1679 = vmatpush.msra.mxu0 0.0
  %1680 = vmatpush.msra.mxu0 0.0
  %1681 = vmatpush.msra.mxu0 0.0
  %1682 = vmatpush.msra.mxu0 0.0
  %1683 = vmatpush.msra.mxu0 0.0
  %1684 = vmatpush.msra.mxu0 0.0
  %1685 = vmatpush.msra.mxu0 0.0
  %1686 = vmatpush.msra.mxu0 0.0
  %1687 = vmatpush.msra.mxu0 %v398
  %1688 = vmatpush.msra.mxu0 %v396
  %1689 = vmatpush.msra.mxu0 %v394
  %1690 = vmatpush.msra.mxu0 %v392
  %1691 = vmatpush.msra.mxu0 %v390
  %1692 = vmatpush.msra.mxu0 %v388
  %1693 = vmatpush.msra.mxu0 %v386
  %1694 = vmatpush.msra.mxu0 %v384
  %1695 = vmatmul.f32.gmra.mxu0 %v1657
  %v1696 = vpop.f32.mrf.mxu0
  %v1697 = vadd.f32 0.0, %v1696
  %1698 = vdwg.mxu0
  %v1699 = vadd.f32 %v1653, %v1677
  %v1700 = vadd.f32 %v1654, %v1697
  %v1701 = vxor.u32 %v1699, 2147483648
  %v1702 = vxor.u32 %v1700, 2147483648
  %v1703 = vmul.f32 %v1701, 1.442695
  %v1704 = vpow.pop %v1703
  %v1705 = vmul.f32 %v1702, 1.442695
  %v1706 = vpow.pop %v1705
  %v1707 = vadd.f32 %v1704, 1.0
  %v1708 = vadd.f32 %v1706, 1.0
  %v1709 = vrcp.pop %v1707
  %v1710 = vmul.f32 %v1707, %v1709
  %v1711 = vsub.f32 1.0, %v1710
  %v1712 = vmul.f32 %v1709, %v1711
  %v1713 = vadd.f32 %v1709, %v1712
  %vm1714 = vweird.f32 %v1707
  %vm1715 = vweird.f32 %v1709
  %vm1716 = vmor %vm1714, %vm1715
  %v1717 = vsel %vm1716, %v1709, %v1713
  %v1718 = vand.u32 2147483647, %v1707
  %vm1719 = vcmp.eq.f32.partialorder %v1718, 8.507059e+37
  %v1720 = vand.u32 %v1707, 2147483648
  %v1721 = vor.u32 1.1754944e-38, %v1720
  %v1722 = vsel %vm1719, %v1721, %v1717
  %v1723 = vmul.f32 1.0, %v1722
  %v1724 = vrcp.pop %v1708
  %v1725 = vmul.f32 %v1708, %v1724
  %v1726 = vsub.f32 1.0, %v1725
  %v1727 = vmul.f32 %v1724, %v1726
  %v1728 = vadd.f32 %v1724, %v1727
  %vm1729 = vweird.f32 %v1708
  %vm1730 = vweird.f32 %v1724
  %vm1731 = vmor %vm1729, %vm1730
  %v1732 = vsel %vm1731, %v1724, %v1728
  %v1733 = vand.u32 2147483647, %v1708
  %vm1734 = vcmp.eq.f32.partialorder %v1733, 8.507059e+37
  %v1735 = vand.u32 %v1708, 2147483648
  %v1736 = vor.u32 1.1754944e-38, %v1735
  %v1737 = vsel %vm1734, %v1736, %v1732
  %v1738 = vmul.f32 1.0, %v1737
  %v1739 = vtanh.pop %v1700
  %v1740 = vld [vmem:[#allocation4] sm:$0xff]
  %1742 = vrot.lane.b32.xlu0 %v1740, 64
  %v1743 = vpop.permute.xlu0 %1742
  %v1745 = vmul.f32 %v1723, %v1743
  %v1746 = vmul.f32 %v1723, %v1739
  %1748 = vrot.lane.b32.xlu0 %v1746, 64
  %v1749 = vpop.permute.xlu0 %1748
  %v1751 = vadd.f32 %v1745, %v1749
  %v1752 = vtanh.pop %v1751
  %v1753 = vmul.f32 %v1738, %v1752
  %1755 = vrot.lane.b32.xlu0 %v1751, 64
  %v1756 = vpop.permute.xlu0 %1755
  %1758 = vst.msk [vmem:[#allocation4] sm:$0xff] %vm191, %v1756
  %1760 = vrot.lane.b32.xlu0 %v1753, 64
  %v1761 = vpop.permute.xlu0 %1760
  %1763 = vst.msk [vmem:[#allocation3] sm:$0xff] %vm191, %v1761
  %v1764 = vld [vmem:[#allocation5] sm:$0xff]
  %v1765 = vadd.f32 %v1764, %v1761
  %1766 = vst.msk [vmem:[#allocation5] sm:$0xff] %vm191, %v1765
  %v1767 = vld [vmem:[#allocation2 + $0xc0] sm:$0xff]
  %v1768 = vld [vmem:[#allocation2 + $0xc8] sm:$0xff]
  %v1769 = vld [vmem:[#allocation3] sm:$0xff]
  %v1771 = vsel %vm191, %v1769, 0
  %1773 = vmatpush.msra.mxu0 0.0
  %1774 = vmatpush.msra.mxu0 0.0
  %1775 = vmatpush.msra.mxu0 0.0
  %1776 = vmatpush.msra.mxu0 0.0
  %1777 = vmatpush.msra.mxu0 0.0
  %1778 = vmatpush.msra.mxu0 0.0
  %1779 = vmatpush.msra.mxu0 0.0
  %1780 = vmatpush.msra.mxu0 0.0
  %1781 = vmatpush.msra.mxu0 %v397
  %1782 = vmatpush.msra.mxu0 %v395
  %1783 = vmatpush.msra.mxu0 %v393
  %1784 = vmatpush.msra.mxu0 %v391
  %1785 = vmatpush.msra.mxu0 %v389
  %1786 = vmatpush.msra.mxu0 %v387
  %1787 = vmatpush.msra.mxu0 %v385
  %1788 = vmatpush.msra.mxu0 %v383
  %1789 = vmatmul.f32.gmra.mxu0 %v1771
  %v1790 = vpop.f32.mrf.mxu0
  %v1791 = vadd.f32 0.0, %v1790
  %1792 = vdwg.mxu0
  %1793 = vmatpush.msra.mxu0 0.0
  %1794 = vmatpush.msra.mxu0 0.0
  %1795 = vmatpush.msra.mxu0 0.0
  %1796 = vmatpush.msra.mxu0 0.0
  %1797 = vmatpush.msra.mxu0 0.0
  %1798 = vmatpush.msra.mxu0 0.0
  %1799 = vmatpush.msra.mxu0 0.0
  %1800 = vmatpush.msra.mxu0 0.0
  %1801 = vmatpush.msra.mxu0 %v398
  %1802 = vmatpush.msra.mxu0 %v396
  %1803 = vmatpush.msra.mxu0 %v394
  %1804 = vmatpush.msra.mxu0 %v392
  %1805 = vmatpush.msra.mxu0 %v390
  %1806 = vmatpush.msra.mxu0 %v388
  %1807 = vmatpush.msra.mxu0 %v386
  %1808 = vmatpush.msra.mxu0 %v384
  %1809 = vmatmul.f32.gmra.mxu0 %v1771
  %v1810 = vpop.f32.mrf.mxu0
  %v1811 = vadd.f32 0.0, %v1810
  %1812 = vdwg.mxu0
  %v1813 = vadd.f32 %v1767, %v1791
  %v1814 = vadd.f32 %v1768, %v1811
  %v1815 = vxor.u32 %v1813, 2147483648
  %v1816 = vxor.u32 %v1814, 2147483648
  %v1817 = vmul.f32 %v1815, 1.442695
  %v1818 = vpow.pop %v1817
  %v1819 = vmul.f32 %v1816, 1.442695
  %v1820 = vpow.pop %v1819
  %v1821 = vadd.f32 %v1818, 1.0
  %v1822 = vadd.f32 %v1820, 1.0
  %v1823 = vrcp.pop %v1821
  %v1824 = vmul.f32 %v1821, %v1823
  %v1825 = vsub.f32 1.0, %v1824
  %v1826 = vmul.f32 %v1823, %v1825
  %v1827 = vadd.f32 %v1823, %v1826
  %vm1828 = vweird.f32 %v1821
  %vm1829 = vweird.f32 %v1823
  %vm1830 = vmor %vm1828, %vm1829
  %v1831 = vsel %vm1830, %v1823, %v1827
  %v1832 = vand.u32 2147483647, %v1821
  %vm1833 = vcmp.eq.f32.partialorder %v1832, 8.507059e+37
  %v1834 = vand.u32 %v1821, 2147483648
  %v1835 = vor.u32 1.1754944e-38, %v1834
  %v1836 = vsel %vm1833, %v1835, %v1831
  %v1837 = vmul.f32 1.0, %v1836
  %v1838 = vrcp.pop %v1822
  %v1839 = vmul.f32 %v1822, %v1838
  %v1840 = vsub.f32 1.0, %v1839
  %v1841 = vmul.f32 %v1838, %v1840
  %v1842 = vadd.f32 %v1838, %v1841
  %vm1843 = vweird.f32 %v1822
  %vm1844 = vweird.f32 %v1838
  %vm1845 = vmor %vm1843, %vm1844
  %v1846 = vsel %vm1845, %v1838, %v1842
  %v1847 = vand.u32 2147483647, %v1822
  %vm1848 = vcmp.eq.f32.partialorder %v1847, 8.507059e+37
  %v1849 = vand.u32 %v1822, 2147483648
  %v1850 = vor.u32 1.1754944e-38, %v1849
  %v1851 = vsel %vm1848, %v1850, %v1846
  %v1852 = vmul.f32 1.0, %v1851
  %v1853 = vtanh.pop %v1814
  %v1854 = vld [vmem:[#allocation4] sm:$0xff]
  %1856 = vrot.lane.b32.xlu0 %v1854, 64
  %v1857 = vpop.permute.xlu0 %1856
  %v1859 = vmul.f32 %v1837, %v1857
  %v1860 = vmul.f32 %v1837, %v1853
  %1862 = vrot.lane.b32.xlu0 %v1860, 64
  %v1863 = vpop.permute.xlu0 %1862
  %v1865 = vadd.f32 %v1859, %v1863
  %v1866 = vtanh.pop %v1865
  %v1867 = vmul.f32 %v1852, %v1866
  %1869 = vrot.lane.b32.xlu0 %v1865, 64
  %v1870 = vpop.permute.xlu0 %1869
  %1872 = vst.msk [vmem:[#allocation4] sm:$0xff] %vm191, %v1870
  %1874 = vrot.lane.b32.xlu0 %v1867, 64
  %v1875 = vpop.permute.xlu0 %1874
  %1877 = vst.msk [vmem:[#allocation3] sm:$0xff] %vm191, %v1875
  %v1878 = vld [vmem:[#allocation5] sm:$0xff]
  %v1879 = vadd.f32 %v1878, %v1875
  %1880 = vst.msk [vmem:[#allocation5] sm:$0xff] %vm191, %v1879
  %v1881 = vld [vmem:[#allocation2 + $0xd0] sm:$0xff]
  %v1882 = vld [vmem:[#allocation2 + $0xd8] sm:$0xff]
  %v1883 = vld [vmem:[#allocation3] sm:$0xff]
  %v1885 = vsel %vm191, %v1883, 0
  %1887 = vmatpush.msra.mxu0 0.0
  %1888 = vmatpush.msra.mxu0 0.0
  %1889 = vmatpush.msra.mxu0 0.0
  %1890 = vmatpush.msra.mxu0 0.0
  %1891 = vmatpush.msra.mxu0 0.0
  %1892 = vmatpush.msra.mxu0 0.0
  %1893 = vmatpush.msra.mxu0 0.0
  %1894 = vmatpush.msra.mxu0 0.0
  %1895 = vmatpush.msra.mxu0 %v397
  %1896 = vmatpush.msra.mxu0 %v395
  %1897 = vmatpush.msra.mxu0 %v393
  %1898 = vmatpush.msra.mxu0 %v391
  %1899 = vmatpush.msra.mxu0 %v389
  %1900 = vmatpush.msra.mxu0 %v387
  %1901 = vmatpush.msra.mxu0 %v385
  %1902 = vmatpush.msra.mxu0 %v383
  %1903 = vmatmul.f32.gmra.mxu0 %v1885
  %v1904 = vpop.f32.mrf.mxu0
  %v1905 = vadd.f32 0.0, %v1904
  %1906 = vdwg.mxu0
  %1907 = vmatpush.msra.mxu0 0.0
  %1908 = vmatpush.msra.mxu0 0.0
  %1909 = vmatpush.msra.mxu0 0.0
  %1910 = vmatpush.msra.mxu0 0.0
  %1911 = vmatpush.msra.mxu0 0.0
  %1912 = vmatpush.msra.mxu0 0.0
  %1913 = vmatpush.msra.mxu0 0.0
  %1914 = vmatpush.msra.mxu0 0.0
  %1915 = vmatpush.msra.mxu0 %v398
  %1916 = vmatpush.msra.mxu0 %v396
  %1917 = vmatpush.msra.mxu0 %v394
  %1918 = vmatpush.msra.mxu0 %v392
  %1919 = vmatpush.msra.mxu0 %v390
  %1920 = vmatpush.msra.mxu0 %v388
  %1921 = vmatpush.msra.mxu0 %v386
  %1922 = vmatpush.msra.mxu0 %v384
  %1923 = vmatmul.f32.gmra.mxu0 %v1885
  %v1924 = vpop.f32.mrf.mxu0
  %v1925 = vadd.f32 0.0, %v1924
  %1926 = vdwg.mxu0
  %v1927 = vadd.f32 %v1881, %v1905
  %v1928 = vadd.f32 %v1882, %v1925
  %v1929 = vxor.u32 %v1927, 2147483648
  %v1930 = vxor.u32 %v1928, 2147483648
  %v1931 = vmul.f32 %v1929, 1.442695
  %v1932 = vpow.pop %v1931
  %v1933 = vmul.f32 %v1930, 1.442695
  %v1934 = vpow.pop %v1933
  %v1935 = vadd.f32 %v1932, 1.0
  %v1936 = vadd.f32 %v1934, 1.0
  %v1937 = vrcp.pop %v1935
  %v1938 = vmul.f32 %v1935, %v1937
  %v1939 = vsub.f32 1.0, %v1938
  %v1940 = vmul.f32 %v1937, %v1939
  %v1941 = vadd.f32 %v1937, %v1940
  %vm1942 = vweird.f32 %v1935
  %vm1943 = vweird.f32 %v1937
  %vm1944 = vmor %vm1942, %vm1943
  %v1945 = vsel %vm1944, %v1937, %v1941
  %v1946 = vand.u32 2147483647, %v1935
  %vm1947 = vcmp.eq.f32.partialorder %v1946, 8.507059e+37
  %v1948 = vand.u32 %v1935, 2147483648
  %v1949 = vor.u32 1.1754944e-38, %v1948
  %v1950 = vsel %vm1947, %v1949, %v1945
  %v1951 = vmul.f32 1.0, %v1950
  %v1952 = vrcp.pop %v1936
  %v1953 = vmul.f32 %v1936, %v1952
  %v1954 = vsub.f32 1.0, %v1953
  %v1955 = vmul.f32 %v1952, %v1954
  %v1956 = vadd.f32 %v1952, %v1955
  %vm1957 = vweird.f32 %v1936
  %vm1958 = vweird.f32 %v1952
  %vm1959 = vmor %vm1957, %vm1958
  %v1960 = vsel %vm1959, %v1952, %v1956
  %v1961 = vand.u32 2147483647, %v1936
  %vm1962 = vcmp.eq.f32.partialorder %v1961, 8.507059e+37
  %v1963 = vand.u32 %v1936, 2147483648
  %v1964 = vor.u32 1.1754944e-38, %v1963
  %v1965 = vsel %vm1962, %v1964, %v1960
  %v1966 = vmul.f32 1.0, %v1965
  %v1967 = vtanh.pop %v1928
  %v1968 = vld [vmem:[#allocation4] sm:$0xff]
  %1970 = vrot.lane.b32.xlu0 %v1968, 64
  %v1971 = vpop.permute.xlu0 %1970
  %v1973 = vmul.f32 %v1951, %v1971
  %v1974 = vmul.f32 %v1951, %v1967
  %1976 = vrot.lane.b32.xlu0 %v1974, 64
  %v1977 = vpop.permute.xlu0 %1976
  %v1979 = vadd.f32 %v1973, %v1977
  %v1980 = vtanh.pop %v1979
  %v1981 = vmul.f32 %v1966, %v1980
  %1983 = vrot.lane.b32.xlu0 %v1979, 64
  %v1984 = vpop.permute.xlu0 %1983
  %1986 = vst.msk [vmem:[#allocation4] sm:$0xff] %vm191, %v1984
  %1988 = vrot.lane.b32.xlu0 %v1981, 64
  %v1989 = vpop.permute.xlu0 %1988
  %1991 = vst.msk [vmem:[#allocation3] sm:$0xff] %vm191, %v1989
  %v1992 = vld [vmem:[#allocation5] sm:$0xff]
  %v1993 = vadd.f32 %v1992, %v1989
  %1994 = vst.msk [vmem:[#allocation5] sm:$0xff] %vm191, %v1993
  %v1995 = vld [vmem:[#allocation5] sm:$0xff]
  %v1996 = vmul.f32 %v1995, 0.071428575
  %v1997 = vld [vmem:[%s6] sm:$0xff]
  %v1998 = vld [vmem:[%s6 + $0x8] sm:$0xff]
  %v1999 = vld [vmem:[%s6 + $0x10] sm:$0xff]
  %v2000 = vld [vmem:[%s6 + $0x18] sm:$0xff]
  %v2001 = vld [vmem:[%s6 + $0x20] sm:$0xff]
  %v2002 = vld [vmem:[%s6 + $0x28] sm:$0xff]
  %v2003 = vld [vmem:[%s6 + $0x30] sm:$0xff]
  %v2004 = vld [vmem:[%s6 + $0x38] sm:$0xff]
  %v2005 = vld [vmem:[%s7] sm:$0x1]
  %v2007 = vperm.slane %v2005, 0
  %v2010 = vsel %vm191, %v1996, 0
  %2012 = vmatpush.msra.mxu0 0.0
  %2013 = vmatpush.msra.mxu0 0.0
  %2014 = vmatpush.msra.mxu0 0.0
  %2015 = vmatpush.msra.mxu0 0.0
  %2016 = vmatpush.msra.mxu0 0.0
  %2017 = vmatpush.msra.mxu0 0.0
  %2018 = vmatpush.msra.mxu0 0.0
  %2019 = vmatpush.msra.mxu0 0.0
  %2020 = vmatpush.msra.mxu0 %v2004
  %2021 = vmatpush.msra.mxu0 %v2003
  %2022 = vmatpush.msra.mxu0 %v2002
  %2023 = vmatpush.msra.mxu0 %v2001
  %2024 = vmatpush.msra.mxu0 %v2000
  %2025 = vmatpush.msra.mxu0 %v1999
  %2026 = vmatpush.msra.mxu0 %v1998
  %2027 = vmatpush.msra.mxu0 %v1997
  %2028 = vmatmul.f32.gmra.mxu0 %v2010
  %v2029 = vpop.f32.mrf.mxu0
  %v2030 = vadd.f32 %v2007, %v2029
  %2031 = vdwg.mxu0
  %vm2032 = vcmask 48128
  %2033 = vst.msk [vmem:[%s8] sm:$0xff] %vm2032, %v2030
  // Predicated region
  $region34: #{_calstm_var_avg_forward.1} parent=0 // pred_check
    _
  $region35: #{_calstm_var_avg_forward.1} parent=0 // pred_check_branch
    %2035 = sbr.rel (0) target = $region37
  $region36: #{_calstm_var_avg_forward.1} parent=0 // pred_region
    _
  $region37: #{_calstm_var_avg_forward.1} parent=0 // pred_fallthru
    _
  // Predicated region
  $region38: #{_calstm_var_avg_forward.1} parent=0 // pred_check
    _
  $region39: #{_calstm_var_avg_forward.1} parent=0 // pred_check_branch
    %2037 = sbr.rel (0) target = $region41
  $region40: #{_calstm_var_avg_forward.1} parent=0 // pred_region
    _
  $region41: #{_calstm_var_avg_forward.1} parent=0 // pred_fallthru
    _

</llo_original>
